<compile_context>
chip_gen: v7x
topology: tpu7x:2x2x1
jax: 0.10.0
libtpu: 0.0.40
codegen_flags: <defaults>
</compile_context>

<pallas_src>
import jax
import jax.numpy as jnp
from jax import lax
from jax.experimental import pallas as pl
from jax.experimental.pallas import tpu as pltpu

HIDDEN = 32
INPUT_DIM = 1
NUM_LAYERS = 2
OUTPUT_DIM = 1


def lstm_kernel(x_ref,     # (T, Bt, 1)  time-major inputs
                wih0_ref,  # (1, 4H)     W_ih_l0 (input_dim==1), gate cols [i,f,o,g]
                b0_ref,    # (1, 4H)     b_ih_l0 + b_hh_l0 (reordered)
                wa_ref,    # (H, 8H)     [Whh0^T | Wih1^T] (reordered)
                whh1_ref,  # (H, 4H)     Whh1^T (reordered)
                b1_ref,    # (1, 4H)     b_ih_l1 + b_hh_l1 (reordered)
                fcw_ref,   # (1, H)
                fcb_ref,   # (1, 1)
                out_ref):  # (Bt, 1)
    T, B, _ = x_ref.shape
    H = HIDDEN
    H3 = 3 * H

    # Hoist weight loads out of the recurrence (loaded once into vregs).
    wih0 = wih0_ref[...]
    b0 = b0_ref[...]
    wa = wa_ref[...]
    whh1 = whh1_ref[...]
    b1 = b1_ref[...]

    zeros_h = jnp.zeros((B, H), jnp.float32)
    init = (zeros_h, zeros_h, zeros_h, zeros_h,
            jnp.zeros((B, 4 * H), jnp.float32))   # r0 = h1(-1) @ Whh0 = 0

    def step(t, carry):
        h1, c1, h2, c2, r0 = carry

        # Issue h2(t-1) @ Whh1 first: its operand is a loop carry (ready now),
        # so this MXU pass overlaps layer-0's VPU/EUP work below.
        r2 = jnp.dot(h2, whh1, preferred_element_type=jnp.float32)      # (B, 4H)

        # ---- layer 0: in-kernel rank-1 input projection (input_dim == 1)
        #      + carried recurrent term h1(t-1) @ Whh0
        g0 = x_ref[t] * wih0 + b0 + r0                                  # (B, 4H)
        s0 = jax.nn.sigmoid(g0[:, :H3])                                 # [i | f | o]
        gg0 = jnp.tanh(g0[:, H3:])                                      # g
        c1n = s0[:, H:2 * H] * c1 + s0[:, :H] * gg0
        h1n = s0[:, 2 * H:H3] * jnp.tanh(c1n)

        # ---- one fused (B,H)@(H,8H) MXU pass: h1(t) @ [Whh0 | Wih1]
        #      cols 0:4H  -> recurrent gates0 for t+1 (carried)
        #      cols 4H:8H -> layer-1 input term for t
        ra = jnp.dot(h1n, wa, preferred_element_type=jnp.float32)       # (B, 8H)
        r0n = ra[:, :4 * H]

        # ---- layer 1
        g1 = ra[:, 4 * H:] + r2 + b1                                    # (B, 4H)
        s1 = jax.nn.sigmoid(g1[:, :H3])
        gg1 = jnp.tanh(g1[:, H3:])
        c2n = s1[:, H:2 * H] * c2 + s1[:, :H] * gg1
        h2n = s1[:, 2 * H:H3] * jnp.tanh(c2n)

        return (h1n, c1n, h2n, c2n, r0n)

    _, _, h2, _, _ = lax.fori_loop(0, T, step, init, unroll=min(T, 8))

    # fc(out[:, -1, :]) : (B, H) . (H,) + bias -> (B, 1)
    # TODO(synk): if OUTPUT_DIM grows, pad the FC output to a lane-dense width.
    out_ref[...] = (jnp.sum(h2 * fcw_ref[...], axis=-1, keepdims=True)
                    + fcb_ref[...])


def _reorder_gates(w):
    """Reorder last-axis gate blocks from PyTorch [i, f, g, o] to [i, f, o, g]."""
    H = HIDDEN
    return jnp.concatenate(
        [w[..., :2 * H], w[..., 3 * H:4 * H], w[..., 2 * H:3 * H]], axis=-1)


def lstm_forward(x, params):
    """x: (B, T, 1) float32 -> (B, 1) float32."""
    B, T, _ = x.shape
    H = HIDDEN

    # Per-program batch tile capped at 128 rows (vreg budget); pad B up to a
    # multiple of the tile so the grid divides evenly.
    B_pad = max(8, ((B + 7) // 8) * 8)
    B_TILE = min(128, B_pad)
    B_pad = ((B_pad + B_TILE - 1) // B_TILE) * B_TILE
    n_b = B_pad // B_TILE

    # Transposed + gate-reordered weights.
    wih0 = _reorder_gates(params["w_ih_l0"][:, 0]).reshape(1, 4 * H)     # (1, 4H)
    b0 = _reorder_gates(params["b_ih_l0"] + params["b_hh_l0"]).reshape(1, 4 * H)
    whh0 = _reorder_gates(params["w_hh_l0"].T)                           # (H, 4H)
    wih1 = _reorder_gates(params["w_ih_l1"].T)                           # (H, 4H)
    whh1 = _reorder_gates(params["w_hh_l1"].T)                           # (H, 4H)
    b1 = _reorder_gates(params["b_ih_l1"] + params["b_hh_l1"]).reshape(1, 4 * H)

    # Fused layer-0-recurrent / layer-1-input weight: h1(t) @ [Whh0 | Wih1].
    wa = jnp.concatenate([whh0, wih1], axis=1)                           # (H, 8H)

    fcw = params["fc_w"].reshape(1, H)
    fcb = params["fc_b"].reshape(1, 1)

    # Time-major input; padded batch rows are zeros (computed, then sliced off).
    x_tm = jnp.zeros((T, B_pad, 1), jnp.float32).at[:, :B].set(
        jnp.transpose(x, (1, 0, 2)))

    def _bcast2(shape):
        return pl.BlockSpec(shape, lambda b: (0, 0))

    out = pl.pallas_call(
        lstm_kernel,
        out_shape=jax.ShapeDtypeStruct((B_pad, OUTPUT_DIM), jnp.float32),
        grid=(n_b,),
        in_specs=[
            pl.BlockSpec((T, B_TILE, 1), lambda b: (0, b, 0)),   # x, batch-tiled
            _bcast2((1, 4 * H)),                                 # wih0
            _bcast2((1, 4 * H)),                                 # b0
            _bcast2((H, 8 * H)),                                 # wa
            _bcast2((H, 4 * H)),                                 # whh1
            _bcast2((1, 4 * H)),                                 # b1
            _bcast2((1, H)),                                     # fcw
            _bcast2((1, 1)),                                     # fcb
        ],
        out_specs=pl.BlockSpec((B_TILE, OUTPUT_DIM), lambda b: (b, 0)),
        compiler_params=pltpu.CompilerParams(
            dimension_semantics=("parallel",)),
    )(x_tm, wih0, b0, wa, whh1, b1, fcw, fcb)
    return out[:B]


def lstm_reference(x, params):
    """Pure-JAX reference matching torch.nn.LSTM(batch_first=True) + Linear."""
    B, T, _ = x.shape
    H = HIDDEN

    def cell(h, c, xw, w_hh, b_ih, b_hh):
        gates = xw + h @ w_hh.T + b_ih + b_hh
        i = jax.nn.sigmoid(gates[:, 0:H])
        f = jax.nn.sigmoid(gates[:, H:2 * H])
        g = jnp.tanh(gates[:, 2 * H:3 * H])
        o = jax.nn.sigmoid(gates[:, 3 * H:4 * H])
        c_new = f * c + i * g
        h_new = o * jnp.tanh(c_new)
        return h_new, c_new

    h1 = jnp.zeros((B, H)); c1 = jnp.zeros((B, H))
    h2 = jnp.zeros((B, H)); c2 = jnp.zeros((B, H))
    for t in range(T):
        x_t = x[:, t, :]                                                 # (B, 1)
        h1, c1 = cell(h1, c1, x_t @ params["w_ih_l0"].T,
                      params["w_hh_l0"], params["b_ih_l0"], params["b_hh_l0"])
        h2, c2 = cell(h2, c2, h1 @ params["w_ih_l1"].T,
                      params["w_hh_l1"], params["b_ih_l1"], params["b_hh_l1"])
    return h2 @ params["fc_w"].T + params["fc_b"]


def init_params(key):
    """Deterministic init, PyTorch-style uniform(-1/sqrt(H), 1/sqrt(H))."""
    k = 1.0 / jnp.sqrt(jnp.float32(HIDDEN))
    keys = jax.random.split(key, 10)
    u = lambda kk, shape: jax.random.uniform(kk, shape, jnp.float32, -k, k)
    return {
        "w_ih_l0": u(keys[0], (4 * HIDDEN, INPUT_DIM)),
        "w_hh_l0": u(keys[1], (4 * HIDDEN, HIDDEN)),
        "b_ih_l0": u(keys[2], (4 * HIDDEN,)),
        "b_hh_l0": u(keys[3], (4 * HIDDEN,)),
        "w_ih_l1": u(keys[4], (4 * HIDDEN, HIDDEN)),
        "w_hh_l1": u(keys[5], (4 * HIDDEN, HIDDEN)),
        "b_ih_l1": u(keys[6], (4 * HIDDEN,)),
        "b_hh_l1": u(keys[7], (4 * HIDDEN,)),
        "fc_w":    u(keys[8], (OUTPUT_DIM, HIDDEN)),
        "fc_b":    u(keys[9], (OUTPUT_DIM,)),
    }


if __name__ == "__main__":
    key = jax.random.PRNGKey(0)
    kp, kx = jax.random.split(key)
    params = init_params(kp)

    B, T = 2, 8
    x = jax.random.normal(kx, (B, T, INPUT_DIM), jnp.float32)

    out = lstm_forward(x, params)
    out = jax.block_until_ready(out)

    ref = lstm_reference(x, params)
    assert out.shape == (B, OUTPUT_DIM)
    assert jnp.allclose(out, ref, atol=1e-5, rtol=1e-5), (out, ref)

    print("KERNEL_OK")
</pallas_src>

<mosaic_0001>
module attributes {stable_mosaic.version = 11 : i64} {
  func.func @lstm_kernel(%arg0: i32, %arg1: memref<8x8x1xf32, #tpu.memory_space<vmem>>, %arg2: memref<1x128xf32, #tpu.memory_space<vmem>>, %arg3: memref<1x128xf32, #tpu.memory_space<vmem>>, %arg4: memref<32x256xf32, #tpu.memory_space<vmem>>, %arg5: memref<32x128xf32, #tpu.memory_space<vmem>>, %arg6: memref<1x128xf32, #tpu.memory_space<vmem>>, %arg7: memref<1x32xf32, #tpu.memory_space<vmem>>, %arg8: memref<1x1xf32, #tpu.memory_space<vmem>>, %arg9: memref<8x1xf32, #tpu.memory_space<vmem>>) attributes {dimension_semantics = [#tpu.dimension_semantics<parallel>], iteration_bounds = array<i64: 1>, scalar_prefetch = 0 : i64, scratch_operands = 0 : i64, tpu.core_type = #tpu.core_type<tc>, window_params = [{transform_indices = @transform_0, window_bounds = array<i64: 8, 8, 1>}, {pipeline_mode = #tpu.pipeline_mode<synchronous>, transform_indices = @transform_1, window_bounds = array<i64: 1, 128>}, {pipeline_mode = #tpu.pipeline_mode<synchronous>, transform_indices = @transform_2, window_bounds = array<i64: 1, 128>}, {pipeline_mode = #tpu.pipeline_mode<synchronous>, transform_indices = @transform_3, window_bounds = array<i64: 32, 256>}, {pipeline_mode = #tpu.pipeline_mode<synchronous>, transform_indices = @transform_4, window_bounds = array<i64: 32, 128>}, {pipeline_mode = #tpu.pipeline_mode<synchronous>, transform_indices = @transform_5, window_bounds = array<i64: 1, 128>}, {pipeline_mode = #tpu.pipeline_mode<synchronous>, transform_indices = @transform_6, window_bounds = array<i64: 1, 32>}, {pipeline_mode = #tpu.pipeline_mode<synchronous>, transform_indices = @transform_7, window_bounds = array<i64: 1, 1>}, {transform_indices = @transform_8, window_bounds = array<i64: 8, 1>}]} {
    %c0 = arith.constant 0 : index
    %c0_0 = arith.constant 0 : index
    %0 = vector.load %arg2[%c0, %c0_0] : memref<1x128xf32, #tpu.memory_space<vmem>>, vector<1x128xf32>
    %c0_1 = arith.constant 0 : index
    %c0_2 = arith.constant 0 : index
    %1 = vector.load %arg3[%c0_1, %c0_2] : memref<1x128xf32, #tpu.memory_space<vmem>>, vector<1x128xf32>
    %c0_3 = arith.constant 0 : index
    %c0_4 = arith.constant 0 : index
    %2 = vector.load %arg4[%c0_3, %c0_4] : memref<32x256xf32, #tpu.memory_space<vmem>>, vector<32x256xf32>
    %c0_5 = arith.constant 0 : index
    %c0_6 = arith.constant 0 : index
    %3 = vector.load %arg5[%c0_5, %c0_6] : memref<32x128xf32, #tpu.memory_space<vmem>>, vector<32x128xf32>
    %c0_7 = arith.constant 0 : index
    %c0_8 = arith.constant 0 : index
    %4 = vector.load %arg6[%c0_7, %c0_8] : memref<1x128xf32, #tpu.memory_space<vmem>>, vector<1x128xf32>
    %cst = arith.constant 0.000000e+00 : f32
    %5 = vector.broadcast %cst : f32 to vector<8x32xf32>
    %cst_9 = arith.constant 0.000000e+00 : f32
    %6 = vector.broadcast %cst_9 : f32 to vector<8x128xf32>
    %c0_i32 = arith.constant 0 : i32
    %cst_10 = arith.constant dense<0.000000e+00> : vector<8x128xf32>
    %7 = tpu.matmul %5, %3, %cst_10 {dimension_numbers = #tpu.dot_dimension_numbers<[1], [0], [0], [1], [0, 0, 1, 1], [], []>} : vector<8x32xf32>, vector<32x128xf32>, vector<8x128xf32> -> vector<8x128xf32>
    %8 = arith.index_cast %c0_i32 : i32 to index
    %c0_11 = arith.constant 0 : index
    %c0_12 = arith.constant 0 : index
    %9 = vector.load %arg1[%8, %c0_11, %c0_12] : memref<8x8x1xf32, #tpu.memory_space<vmem>>, vector<1x8x1xf32>
    %10 = vector.shape_cast %9 : vector<1x8x1xf32> to vector<8x1xf32>
    %11 = vector.broadcast %10 : vector<8x1xf32> to vector<8x128xf32>
    %12 = vector.broadcast %0 : vector<1x128xf32> to vector<8x128xf32>
    %13 = arith.mulf %11, %12 : vector<8x128xf32>
    %14 = vector.broadcast %1 : vector<1x128xf32> to vector<8x128xf32>
    %15 = arith.addf %13, %14 : vector<8x128xf32>
    %16 = arith.addf %15, %6 : vector<8x128xf32>
    %17 = vector.extract_strided_slice %16 {offsets = [0, 0], sizes = [8, 96], strides = [1, 1]} : vector<8x128xf32> to vector<8x96xf32>
    %18 = arith.negf %17 : vector<8x96xf32>
    %19 = math.exp %18 : vector<8x96xf32>
    %cst_13 = arith.constant 1.000000e+00 : f32
    %20 = vector.broadcast %cst_13 : f32 to vector<8x96xf32>
    %21 = arith.addf %20, %19 : vector<8x96xf32>
    %22 = arith.divf %20, %21 : vector<8x96xf32>
    %23 = vector.extract_strided_slice %16 {offsets = [0, 96], sizes = [8, 32], strides = [1, 1]} : vector<8x128xf32> to vector<8x32xf32>
    %24 = math.tanh %23 : vector<8x32xf32>
    %25 = vector.extract_strided_slice %22 {offsets = [0, 32], sizes = [8, 32], strides = [1, 1]} : vector<8x96xf32> to vector<8x32xf32>
    %26 = arith.mulf %25, %5 : vector<8x32xf32>
    %27 = vector.extract_strided_slice %22 {offsets = [0, 0], sizes = [8, 32], strides = [1, 1]} : vector<8x96xf32> to vector<8x32xf32>
    %28 = arith.mulf %27, %24 : vector<8x32xf32>
    %29 = arith.addf %26, %28 : vector<8x32xf32>
    %30 = vector.extract_strided_slice %22 {offsets = [0, 64], sizes = [8, 32], strides = [1, 1]} : vector<8x96xf32> to vector<8x32xf32>
    %31 = math.tanh %29 : vector<8x32xf32>
    %32 = arith.mulf %30, %31 : vector<8x32xf32>
    %cst_14 = arith.constant dense<0.000000e+00> : vector<8x256xf32>
    %33 = tpu.matmul %32, %2, %cst_14 {dimension_numbers = #tpu.dot_dimension_numbers<[1], [0], [0], [1], [0, 0, 1, 1], [], []>} : vector<8x32xf32>, vector<32x256xf32>, vector<8x256xf32> -> vector<8x256xf32>
    %34 = vector.extract_strided_slice %33 {offsets = [0, 0], sizes = [8, 128], strides = [1, 1]} : vector<8x256xf32> to vector<8x128xf32>
    %35 = vector.extract_strided_slice %33 {offsets = [0, 128], sizes = [8, 128], strides = [1, 1]} : vector<8x256xf32> to vector<8x128xf32>
    %36 = arith.addf %35, %7 : vector<8x128xf32>
    %37 = vector.broadcast %4 : vector<1x128xf32> to vector<8x128xf32>
    %38 = arith.addf %36, %37 : vector<8x128xf32>
    %39 = vector.extract_strided_slice %38 {offsets = [0, 0], sizes = [8, 96], strides = [1, 1]} : vector<8x128xf32> to vector<8x96xf32>
    %40 = arith.negf %39 : vector<8x96xf32>
    %41 = math.exp %40 : vector<8x96xf32>
    %cst_15 = arith.constant 1.000000e+00 : f32
    %42 = vector.broadcast %cst_15 : f32 to vector<8x96xf32>
    %43 = arith.addf %42, %41 : vector<8x96xf32>
    %44 = arith.divf %42, %43 : vector<8x96xf32>
    %45 = vector.extract_strided_slice %38 {offsets = [0, 96], sizes = [8, 32], strides = [1, 1]} : vector<8x128xf32> to vector<8x32xf32>
    %46 = math.tanh %45 : vector<8x32xf32>
    %47 = vector.extract_strided_slice %44 {offsets = [0, 32], sizes = [8, 32], strides = [1, 1]} : vector<8x96xf32> to vector<8x32xf32>
    %48 = arith.mulf %47, %5 : vector<8x32xf32>
    %49 = vector.extract_strided_slice %44 {offsets = [0, 0], sizes = [8, 32], strides = [1, 1]} : vector<8x96xf32> to vector<8x32xf32>
    %50 = arith.mulf %49, %46 : vector<8x32xf32>
    %51 = arith.addf %48, %50 : vector<8x32xf32>
    %52 = vector.extract_strided_slice %44 {offsets = [0, 64], sizes = [8, 32], strides = [1, 1]} : vector<8x96xf32> to vector<8x32xf32>
    %53 = math.tanh %51 : vector<8x32xf32>
    %54 = arith.mulf %52, %53 : vector<8x32xf32>
    %c1_i32 = arith.constant 1 : i32
    %cst_16 = arith.constant dense<0.000000e+00> : vector<8x128xf32>
    %55 = tpu.matmul %54, %3, %cst_16 {dimension_numbers = #tpu.dot_dimension_numbers<[1], [0], [0], [1], [0, 0, 1, 1], [], []>} : vector<8x32xf32>, vector<32x128xf32>, vector<8x128xf32> -> vector<8x128xf32>
    %56 = arith.index_cast %c1_i32 : i32 to index
    %c0_17 = arith.constant 0 : index
    %c0_18 = arith.constant 0 : index
    %57 = vector.load %arg1[%56, %c0_17, %c0_18] : memref<8x8x1xf32, #tpu.memory_space<vmem>>, vector<1x8x1xf32>
    %58 = vector.shape_cast %57 : vector<1x8x1xf32> to vector<8x1xf32>
    %59 = vector.broadcast %58 : vector<8x1xf32> to vector<8x128xf32>
    %60 = vector.broadcast %0 : vector<1x128xf32> to vector<8x128xf32>
    %61 = arith.mulf %59, %60 : vector<8x128xf32>
    %62 = vector.broadcast %1 : vector<1x128xf32> to vector<8x128xf32>
    %63 = arith.addf %61, %62 : vector<8x128xf32>
    %64 = arith.addf %63, %34 : vector<8x128xf32>
    %65 = vector.extract_strided_slice %64 {offsets = [0, 0], sizes = [8, 96], strides = [1, 1]} : vector<8x128xf32> to vector<8x96xf32>
    %66 = arith.negf %65 : vector<8x96xf32>
    %67 = math.exp %66 : vector<8x96xf32>
    %cst_19 = arith.constant 1.000000e+00 : f32
    %68 = vector.broadcast %cst_19 : f32 to vector<8x96xf32>
    %69 = arith.addf %68, %67 : vector<8x96xf32>
    %70 = arith.divf %68, %69 : vector<8x96xf32>
    %71 = vector.extract_strided_slice %64 {offsets = [0, 96], sizes = [8, 32], strides = [1, 1]} : vector<8x128xf32> to vector<8x32xf32>
    %72 = math.tanh %71 : vector<8x32xf32>
    %73 = vector.extract_strided_slice %70 {offsets = [0, 32], sizes = [8, 32], strides = [1, 1]} : vector<8x96xf32> to vector<8x32xf32>
    %74 = arith.mulf %73, %29 : vector<8x32xf32>
    %75 = vector.extract_strided_slice %70 {offsets = [0, 0], sizes = [8, 32], strides = [1, 1]} : vector<8x96xf32> to vector<8x32xf32>
    %76 = arith.mulf %75, %72 : vector<8x32xf32>
    %77 = arith.addf %74, %76 : vector<8x32xf32>
    %78 = vector.extract_strided_slice %70 {offsets = [0, 64], sizes = [8, 32], strides = [1, 1]} : vector<8x96xf32> to vector<8x32xf32>
    %79 = math.tanh %77 : vector<8x32xf32>
    %80 = arith.mulf %78, %79 : vector<8x32xf32>
    %cst_20 = arith.constant dense<0.000000e+00> : vector<8x256xf32>
    %81 = tpu.matmul %80, %2, %cst_20 {dimension_numbers = #tpu.dot_dimension_numbers<[1], [0], [0], [1], [0, 0, 1, 1], [], []>} : vector<8x32xf32>, vector<32x256xf32>, vector<8x256xf32> -> vector<8x256xf32>
    %82 = vector.extract_strided_slice %81 {offsets = [0, 0], sizes = [8, 128], strides = [1, 1]} : vector<8x256xf32> to vector<8x128xf32>
    %83 = vector.extract_strided_slice %81 {offsets = [0, 128], sizes = [8, 128], strides = [1, 1]} : vector<8x256xf32> to vector<8x128xf32>
    %84 = arith.addf %83, %55 : vector<8x128xf32>
    %85 = vector.broadcast %4 : vector<1x128xf32> to vector<8x128xf32>
    %86 = arith.addf %84, %85 : vector<8x128xf32>
    %87 = vector.extract_strided_slice %86 {offsets = [0, 0], sizes = [8, 96], strides = [1, 1]} : vector<8x128xf32> to vector<8x96xf32>
    %88 = arith.negf %87 : vector<8x96xf32>
    %89 = math.exp %88 : vector<8x96xf32>
    %cst_21 = arith.constant 1.000000e+00 : f32
    %90 = vector.broadcast %cst_21 : f32 to vector<8x96xf32>
    %91 = arith.addf %90, %89 : vector<8x96xf32>
    %92 = arith.divf %90, %91 : vector<8x96xf32>
    %93 = vector.extract_strided_slice %86 {offsets = [0, 96], sizes = [8, 32], strides = [1, 1]} : vector<8x128xf32> to vector<8x32xf32>
    %94 = math.tanh %93 : vector<8x32xf32>
    %95 = vector.extract_strided_slice %92 {offsets = [0, 32], sizes = [8, 32], strides = [1, 1]} : vector<8x96xf32> to vector<8x32xf32>
    %96 = arith.mulf %95, %51 : vector<8x32xf32>
    %97 = vector.extract_strided_slice %92 {offsets = [0, 0], sizes = [8, 32], strides = [1, 1]} : vector<8x96xf32> to vector<8x32xf32>
    %98 = arith.mulf %97, %94 : vector<8x32xf32>
    %99 = arith.addf %96, %98 : vector<8x32xf32>
    %100 = vector.extract_strided_slice %92 {offsets = [0, 64], sizes = [8, 32], strides = [1, 1]} : vector<8x96xf32> to vector<8x32xf32>
    %101 = math.tanh %99 : vector<8x32xf32>
    %102 = arith.mulf %100, %101 : vector<8x32xf32>
    %c2_i32 = arith.constant 2 : i32
    %cst_22 = arith.constant dense<0.000000e+00> : vector<8x128xf32>
    %103 = tpu.matmul %102, %3, %cst_22 {dimension_numbers = #tpu.dot_dimension_numbers<[1], [0], [0], [1], [0, 0, 1, 1], [], []>} : vector<8x32xf32>, vector<32x128xf32>, vector<8x128xf32> -> vector<8x128xf32>
    %104 = arith.index_cast %c2_i32 : i32 to index
    %c0_23 = arith.constant 0 : index
    %c0_24 = arith.constant 0 : index
    %105 = vector.load %arg1[%104, %c0_23, %c0_24] : memref<8x8x1xf32, #tpu.memory_space<vmem>>, vector<1x8x1xf32>
    %106 = vector.shape_cast %105 : vector<1x8x1xf32> to vector<8x1xf32>
    %107 = vector.broadcast %106 : vector<8x1xf32> to vector<8x128xf32>
    %108 = vector.broadcast %0 : vector<1x128xf32> to vector<8x128xf32>
    %109 = arith.mulf %107, %108 : vector<8x128xf32>
    %110 = vector.broadcast %1 : vector<1x128xf32> to vector<8x128xf32>
    %111 = arith.addf %109, %110 : vector<8x128xf32>
    %112 = arith.addf %111, %82 : vector<8x128xf32>
    %113 = vector.extract_strided_slice %112 {offsets = [0, 0], sizes = [8, 96], strides = [1, 1]} : vector<8x128xf32> to vector<8x96xf32>
    %114 = arith.negf %113 : vector<8x96xf32>
    %115 = math.exp %114 : vector<8x96xf32>
    %cst_25 = arith.constant 1.000000e+00 : f32
    %116 = vector.broadcast %cst_25 : f32 to vector<8x96xf32>
    %117 = arith.addf %116, %115 : vector<8x96xf32>
    %118 = arith.divf %116, %117 : vector<8x96xf32>
    %119 = vector.extract_strided_slice %112 {offsets = [0, 96], sizes = [8, 32], strides = [1, 1]} : vector<8x128xf32> to vector<8x32xf32>
    %120 = math.tanh %119 : vector<8x32xf32>
    %121 = vector.extract_strided_slice %118 {offsets = [0, 32], sizes = [8, 32], strides = [1, 1]} : vector<8x96xf32> to vector<8x32xf32>
    %122 = arith.mulf %121, %77 : vector<8x32xf32>
    %123 = vector.extract_strided_slice %118 {offsets = [0, 0], sizes = [8, 32], strides = [1, 1]} : vector<8x96xf32> to vector<8x32xf32>
    %124 = arith.mulf %123, %120 : vector<8x32xf32>
    %125 = arith.addf %122, %124 : vector<8x32xf32>
    %126 = vector.extract_strided_slice %118 {offsets = [0, 64], sizes = [8, 32], strides = [1, 1]} : vector<8x96xf32> to vector<8x32xf32>
    %127 = math.tanh %125 : vector<8x32xf32>
    %128 = arith.mulf %126, %127 : vector<8x32xf32>
    %cst_26 = arith.constant dense<0.000000e+00> : vector<8x256xf32>
    %129 = tpu.matmul %128, %2, %cst_26 {dimension_numbers = #tpu.dot_dimension_numbers<[1], [0], [0], [1], [0, 0, 1, 1], [], []>} : vector<8x32xf32>, vector<32x256xf32>, vector<8x256xf32> -> vector<8x256xf32>
    %130 = vector.extract_strided_slice %129 {offsets = [0, 0], sizes = [8, 128], strides = [1, 1]} : vector<8x256xf32> to vector<8x128xf32>
    %131 = vector.extract_strided_slice %129 {offsets = [0, 128], sizes = [8, 128], strides = [1, 1]} : vector<8x256xf32> to vector<8x128xf32>
    %132 = arith.addf %131, %103 : vector<8x128xf32>
    %133 = vector.broadcast %4 : vector<1x128xf32> to vector<8x128xf32>
    %134 = arith.addf %132, %133 : vector<8x128xf32>
    %135 = vector.extract_strided_slice %134 {offsets = [0, 0], sizes = [8, 96], strides = [1, 1]} : vector<8x128xf32> to vector<8x96xf32>
    %136 = arith.negf %135 : vector<8x96xf32>
    %137 = math.exp %136 : vector<8x96xf32>
    %cst_27 = arith.constant 1.000000e+00 : f32
    %138 = vector.broadcast %cst_27 : f32 to vector<8x96xf32>
    %139 = arith.addf %138, %137 : vector<8x96xf32>
    %140 = arith.divf %138, %139 : vector<8x96xf32>
    %141 = vector.extract_strided_slice %134 {offsets = [0, 96], sizes = [8, 32], strides = [1, 1]} : vector<8x128xf32> to vector<8x32xf32>
    %142 = math.tanh %141 : vector<8x32xf32>
    %143 = vector.extract_strided_slice %140 {offsets = [0, 32], sizes = [8, 32], strides = [1, 1]} : vector<8x96xf32> to vector<8x32xf32>
    %144 = arith.mulf %143, %99 : vector<8x32xf32>
    %145 = vector.extract_strided_slice %140 {offsets = [0, 0], sizes = [8, 32], strides = [1, 1]} : vector<8x96xf32> to vector<8x32xf32>
    %146 = arith.mulf %145, %142 : vector<8x32xf32>
    %147 = arith.addf %144, %146 : vector<8x32xf32>
    %148 = vector.extract_strided_slice %140 {offsets = [0, 64], sizes = [8, 32], strides = [1, 1]} : vector<8x96xf32> to vector<8x32xf32>
    %149 = math.tanh %147 : vector<8x32xf32>
    %150 = arith.mulf %148, %149 : vector<8x32xf32>
    %c3_i32 = arith.constant 3 : i32
    %cst_28 = arith.constant dense<0.000000e+00> : vector<8x128xf32>
    %151 = tpu.matmul %150, %3, %cst_28 {dimension_numbers = #tpu.dot_dimension_numbers<[1], [0], [0], [1], [0, 0, 1, 1], [], []>} : vector<8x32xf32>, vector<32x128xf32>, vector<8x128xf32> -> vector<8x128xf32>
    %152 = arith.index_cast %c3_i32 : i32 to index
    %c0_29 = arith.constant 0 : index
    %c0_30 = arith.constant 0 : index
    %153 = vector.load %arg1[%152, %c0_29, %c0_30] : memref<8x8x1xf32, #tpu.memory_space<vmem>>, vector<1x8x1xf32>
    %154 = vector.shape_cast %153 : vector<1x8x1xf32> to vector<8x1xf32>
    %155 = vector.broadcast %154 : vector<8x1xf32> to vector<8x128xf32>
    %156 = vector.broadcast %0 : vector<1x128xf32> to vector<8x128xf32>
    %157 = arith.mulf %155, %156 : vector<8x128xf32>
    %158 = vector.broadcast %1 : vector<1x128xf32> to vector<8x128xf32>
    %159 = arith.addf %157, %158 : vector<8x128xf32>
    %160 = arith.addf %159, %130 : vector<8x128xf32>
    %161 = vector.extract_strided_slice %160 {offsets = [0, 0], sizes = [8, 96], strides = [1, 1]} : vector<8x128xf32> to vector<8x96xf32>
    %162 = arith.negf %161 : vector<8x96xf32>
    %163 = math.exp %162 : vector<8x96xf32>
    %cst_31 = arith.constant 1.000000e+00 : f32
    %164 = vector.broadcast %cst_31 : f32 to vector<8x96xf32>
    %165 = arith.addf %164, %163 : vector<8x96xf32>
    %166 = arith.divf %164, %165 : vector<8x96xf32>
    %167 = vector.extract_strided_slice %160 {offsets = [0, 96], sizes = [8, 32], strides = [1, 1]} : vector<8x128xf32> to vector<8x32xf32>
    %168 = math.tanh %167 : vector<8x32xf32>
    %169 = vector.extract_strided_slice %166 {offsets = [0, 32], sizes = [8, 32], strides = [1, 1]} : vector<8x96xf32> to vector<8x32xf32>
    %170 = arith.mulf %169, %125 : vector<8x32xf32>
    %171 = vector.extract_strided_slice %166 {offsets = [0, 0], sizes = [8, 32], strides = [1, 1]} : vector<8x96xf32> to vector<8x32xf32>
    %172 = arith.mulf %171, %168 : vector<8x32xf32>
    %173 = arith.addf %170, %172 : vector<8x32xf32>
    %174 = vector.extract_strided_slice %166 {offsets = [0, 64], sizes = [8, 32], strides = [1, 1]} : vector<8x96xf32> to vector<8x32xf32>
    %175 = math.tanh %173 : vector<8x32xf32>
    %176 = arith.mulf %174, %175 : vector<8x32xf32>
    %cst_32 = arith.constant dense<0.000000e+00> : vector<8x256xf32>
    %177 = tpu.matmul %176, %2, %cst_32 {dimension_numbers = #tpu.dot_dimension_numbers<[1], [0], [0], [1], [0, 0, 1, 1], [], []>} : vector<8x32xf32>, vector<32x256xf32>, vector<8x256xf32> -> vector<8x256xf32>
    %178 = vector.extract_strided_slice %177 {offsets = [0, 0], sizes = [8, 128], strides = [1, 1]} : vector<8x256xf32> to vector<8x128xf32>
    %179 = vector.extract_strided_slice %177 {offsets = [0, 128], sizes = [8, 128], strides = [1, 1]} : vector<8x256xf32> to vector<8x128xf32>
    %180 = arith.addf %179, %151 : vector<8x128xf32>
    %181 = vector.broadcast %4 : vector<1x128xf32> to vector<8x128xf32>
    %182 = arith.addf %180, %181 : vector<8x128xf32>
    %183 = vector.extract_strided_slice %182 {offsets = [0, 0], sizes = [8, 96], strides = [1, 1]} : vector<8x128xf32> to vector<8x96xf32>
    %184 = arith.negf %183 : vector<8x96xf32>
    %185 = math.exp %184 : vector<8x96xf32>
    %cst_33 = arith.constant 1.000000e+00 : f32
    %186 = vector.broadcast %cst_33 : f32 to vector<8x96xf32>
    %187 = arith.addf %186, %185 : vector<8x96xf32>
    %188 = arith.divf %186, %187 : vector<8x96xf32>
    %189 = vector.extract_strided_slice %182 {offsets = [0, 96], sizes = [8, 32], strides = [1, 1]} : vector<8x128xf32> to vector<8x32xf32>
    %190 = math.tanh %189 : vector<8x32xf32>
    %191 = vector.extract_strided_slice %188 {offsets = [0, 32], sizes = [8, 32], strides = [1, 1]} : vector<8x96xf32> to vector<8x32xf32>
    %192 = arith.mulf %191, %147 : vector<8x32xf32>
    %193 = vector.extract_strided_slice %188 {offsets = [0, 0], sizes = [8, 32], strides = [1, 1]} : vector<8x96xf32> to vector<8x32xf32>
    %194 = arith.mulf %193, %190 : vector<8x32xf32>
    %195 = arith.addf %192, %194 : vector<8x32xf32>
    %196 = vector.extract_strided_slice %188 {offsets = [0, 64], sizes = [8, 32], strides = [1, 1]} : vector<8x96xf32> to vector<8x32xf32>
    %197 = math.tanh %195 : vector<8x32xf32>
    %198 = arith.mulf %196, %197 : vector<8x32xf32>
    %c4_i32 = arith.constant 4 : i32
    %cst_34 = arith.constant dense<0.000000e+00> : vector<8x128xf32>
    %199 = tpu.matmul %198, %3, %cst_34 {dimension_numbers = #tpu.dot_dimension_numbers<[1], [0], [0], [1], [0, 0, 1, 1], [], []>} : vector<8x32xf32>, vector<32x128xf32>, vector<8x128xf32> -> vector<8x128xf32>
    %200 = arith.index_cast %c4_i32 : i32 to index
    %c0_35 = arith.constant 0 : index
    %c0_36 = arith.constant 0 : index
    %201 = vector.load %arg1[%200, %c0_35, %c0_36] : memref<8x8x1xf32, #tpu.memory_space<vmem>>, vector<1x8x1xf32>
    %202 = vector.shape_cast %201 : vector<1x8x1xf32> to vector<8x1xf32>
    %203 = vector.broadcast %202 : vector<8x1xf32> to vector<8x128xf32>
    %204 = vector.broadcast %0 : vector<1x128xf32> to vector<8x128xf32>
    %205 = arith.mulf %203, %204 : vector<8x128xf32>
    %206 = vector.broadcast %1 : vector<1x128xf32> to vector<8x128xf32>
    %207 = arith.addf %205, %206 : vector<8x128xf32>
    %208 = arith.addf %207, %178 : vector<8x128xf32>
    %209 = vector.extract_strided_slice %208 {offsets = [0, 0], sizes = [8, 96], strides = [1, 1]} : vector<8x128xf32> to vector<8x96xf32>
    %210 = arith.negf %209 : vector<8x96xf32>
    %211 = math.exp %210 : vector<8x96xf32>
    %cst_37 = arith.constant 1.000000e+00 : f32
    %212 = vector.broadcast %cst_37 : f32 to vector<8x96xf32>
    %213 = arith.addf %212, %211 : vector<8x96xf32>
    %214 = arith.divf %212, %213 : vector<8x96xf32>
    %215 = vector.extract_strided_slice %208 {offsets = [0, 96], sizes = [8, 32], strides = [1, 1]} : vector<8x128xf32> to vector<8x32xf32>
    %216 = math.tanh %215 : vector<8x32xf32>
    %217 = vector.extract_strided_slice %214 {offsets = [0, 32], sizes = [8, 32], strides = [1, 1]} : vector<8x96xf32> to vector<8x32xf32>
    %218 = arith.mulf %217, %173 : vector<8x32xf32>
    %219 = vector.extract_strided_slice %214 {offsets = [0, 0], sizes = [8, 32], strides = [1, 1]} : vector<8x96xf32> to vector<8x32xf32>
    %220 = arith.mulf %219, %216 : vector<8x32xf32>
    %221 = arith.addf %218, %220 : vector<8x32xf32>
    %222 = vector.extract_strided_slice %214 {offsets = [0, 64], sizes = [8, 32], strides = [1, 1]} : vector<8x96xf32> to vector<8x32xf32>
    %223 = math.tanh %221 : vector<8x32xf32>
    %224 = arith.mulf %222, %223 : vector<8x32xf32>
    %cst_38 = arith.constant dense<0.000000e+00> : vector<8x256xf32>
    %225 = tpu.matmul %224, %2, %cst_38 {dimension_numbers = #tpu.dot_dimension_numbers<[1], [0], [0], [1], [0, 0, 1, 1], [], []>} : vector<8x32xf32>, vector<32x256xf32>, vector<8x256xf32> -> vector<8x256xf32>
    %226 = vector.extract_strided_slice %225 {offsets = [0, 0], sizes = [8, 128], strides = [1, 1]} : vector<8x256xf32> to vector<8x128xf32>
    %227 = vector.extract_strided_slice %225 {offsets = [0, 128], sizes = [8, 128], strides = [1, 1]} : vector<8x256xf32> to vector<8x128xf32>
    %228 = arith.addf %227, %199 : vector<8x128xf32>
    %229 = vector.broadcast %4 : vector<1x128xf32> to vector<8x128xf32>
    %230 = arith.addf %228, %229 : vector<8x128xf32>
    %231 = vector.extract_strided_slice %230 {offsets = [0, 0], sizes = [8, 96], strides = [1, 1]} : vector<8x128xf32> to vector<8x96xf32>
    %232 = arith.negf %231 : vector<8x96xf32>
    %233 = math.exp %232 : vector<8x96xf32>
    %cst_39 = arith.constant 1.000000e+00 : f32
    %234 = vector.broadcast %cst_39 : f32 to vector<8x96xf32>
    %235 = arith.addf %234, %233 : vector<8x96xf32>
    %236 = arith.divf %234, %235 : vector<8x96xf32>
    %237 = vector.extract_strided_slice %230 {offsets = [0, 96], sizes = [8, 32], strides = [1, 1]} : vector<8x128xf32> to vector<8x32xf32>
    %238 = math.tanh %237 : vector<8x32xf32>
    %239 = vector.extract_strided_slice %236 {offsets = [0, 32], sizes = [8, 32], strides = [1, 1]} : vector<8x96xf32> to vector<8x32xf32>
    %240 = arith.mulf %239, %195 : vector<8x32xf32>
    %241 = vector.extract_strided_slice %236 {offsets = [0, 0], sizes = [8, 32], strides = [1, 1]} : vector<8x96xf32> to vector<8x32xf32>
    %242 = arith.mulf %241, %238 : vector<8x32xf32>
    %243 = arith.addf %240, %242 : vector<8x32xf32>
    %244 = vector.extract_strided_slice %236 {offsets = [0, 64], sizes = [8, 32], strides = [1, 1]} : vector<8x96xf32> to vector<8x32xf32>
    %245 = math.tanh %243 : vector<8x32xf32>
    %246 = arith.mulf %244, %245 : vector<8x32xf32>
    %c5_i32 = arith.constant 5 : i32
    %cst_40 = arith.constant dense<0.000000e+00> : vector<8x128xf32>
    %247 = tpu.matmul %246, %3, %cst_40 {dimension_numbers = #tpu.dot_dimension_numbers<[1], [0], [0], [1], [0, 0, 1, 1], [], []>} : vector<8x32xf32>, vector<32x128xf32>, vector<8x128xf32> -> vector<8x128xf32>
    %248 = arith.index_cast %c5_i32 : i32 to index
    %c0_41 = arith.constant 0 : index
    %c0_42 = arith.constant 0 : index
    %249 = vector.load %arg1[%248, %c0_41, %c0_42] : memref<8x8x1xf32, #tpu.memory_space<vmem>>, vector<1x8x1xf32>
    %250 = vector.shape_cast %249 : vector<1x8x1xf32> to vector<8x1xf32>
    %251 = vector.broadcast %250 : vector<8x1xf32> to vector<8x128xf32>
    %252 = vector.broadcast %0 : vector<1x128xf32> to vector<8x128xf32>
    %253 = arith.mulf %251, %252 : vector<8x128xf32>
    %254 = vector.broadcast %1 : vector<1x128xf32> to vector<8x128xf32>
    %255 = arith.addf %253, %254 : vector<8x128xf32>
    %256 = arith.addf %255, %226 : vector<8x128xf32>
    %257 = vector.extract_strided_slice %256 {offsets = [0, 0], sizes = [8, 96], strides = [1, 1]} : vector<8x128xf32> to vector<8x96xf32>
    %258 = arith.negf %257 : vector<8x96xf32>
    %259 = math.exp %258 : vector<8x96xf32>
    %cst_43 = arith.constant 1.000000e+00 : f32
    %260 = vector.broadcast %cst_43 : f32 to vector<8x96xf32>
    %261 = arith.addf %260, %259 : vector<8x96xf32>
    %262 = arith.divf %260, %261 : vector<8x96xf32>
    %263 = vector.extract_strided_slice %256 {offsets = [0, 96], sizes = [8, 32], strides = [1, 1]} : vector<8x128xf32> to vector<8x32xf32>
    %264 = math.tanh %263 : vector<8x32xf32>
    %265 = vector.extract_strided_slice %262 {offsets = [0, 32], sizes = [8, 32], strides = [1, 1]} : vector<8x96xf32> to vector<8x32xf32>
    %266 = arith.mulf %265, %221 : vector<8x32xf32>
    %267 = vector.extract_strided_slice %262 {offsets = [0, 0], sizes = [8, 32], strides = [1, 1]} : vector<8x96xf32> to vector<8x32xf32>
    %268 = arith.mulf %267, %264 : vector<8x32xf32>
    %269 = arith.addf %266, %268 : vector<8x32xf32>
    %270 = vector.extract_strided_slice %262 {offsets = [0, 64], sizes = [8, 32], strides = [1, 1]} : vector<8x96xf32> to vector<8x32xf32>
    %271 = math.tanh %269 : vector<8x32xf32>
    %272 = arith.mulf %270, %271 : vector<8x32xf32>
    %cst_44 = arith.constant dense<0.000000e+00> : vector<8x256xf32>
    %273 = tpu.matmul %272, %2, %cst_44 {dimension_numbers = #tpu.dot_dimension_numbers<[1], [0], [0], [1], [0, 0, 1, 1], [], []>} : vector<8x32xf32>, vector<32x256xf32>, vector<8x256xf32> -> vector<8x256xf32>
    %274 = vector.extract_strided_slice %273 {offsets = [0, 0], sizes = [8, 128], strides = [1, 1]} : vector<8x256xf32> to vector<8x128xf32>
    %275 = vector.extract_strided_slice %273 {offsets = [0, 128], sizes = [8, 128], strides = [1, 1]} : vector<8x256xf32> to vector<8x128xf32>
    %276 = arith.addf %275, %247 : vector<8x128xf32>
    %277 = vector.broadcast %4 : vector<1x128xf32> to vector<8x128xf32>
    %278 = arith.addf %276, %277 : vector<8x128xf32>
    %279 = vector.extract_strided_slice %278 {offsets = [0, 0], sizes = [8, 96], strides = [1, 1]} : vector<8x128xf32> to vector<8x96xf32>
    %280 = arith.negf %279 : vector<8x96xf32>
    %281 = math.exp %280 : vector<8x96xf32>
    %cst_45 = arith.constant 1.000000e+00 : f32
    %282 = vector.broadcast %cst_45 : f32 to vector<8x96xf32>
    %283 = arith.addf %282, %281 : vector<8x96xf32>
    %284 = arith.divf %282, %283 : vector<8x96xf32>
    %285 = vector.extract_strided_slice %278 {offsets = [0, 96], sizes = [8, 32], strides = [1, 1]} : vector<8x128xf32> to vector<8x32xf32>
    %286 = math.tanh %285 : vector<8x32xf32>
    %287 = vector.extract_strided_slice %284 {offsets = [0, 32], sizes = [8, 32], strides = [1, 1]} : vector<8x96xf32> to vector<8x32xf32>
    %288 = arith.mulf %287, %243 : vector<8x32xf32>
    %289 = vector.extract_strided_slice %284 {offsets = [0, 0], sizes = [8, 32], strides = [1, 1]} : vector<8x96xf32> to vector<8x32xf32>
    %290 = arith.mulf %289, %286 : vector<8x32xf32>
    %291 = arith.addf %288, %290 : vector<8x32xf32>
    %292 = vector.extract_strided_slice %284 {offsets = [0, 64], sizes = [8, 32], strides = [1, 1]} : vector<8x96xf32> to vector<8x32xf32>
    %293 = math.tanh %291 : vector<8x32xf32>
    %294 = arith.mulf %292, %293 : vector<8x32xf32>
    %c6_i32 = arith.constant 6 : i32
    %cst_46 = arith.constant dense<0.000000e+00> : vector<8x128xf32>
    %295 = tpu.matmul %294, %3, %cst_46 {dimension_numbers = #tpu.dot_dimension_numbers<[1], [0], [0], [1], [0, 0, 1, 1], [], []>} : vector<8x32xf32>, vector<32x128xf32>, vector<8x128xf32> -> vector<8x128xf32>
    %296 = arith.index_cast %c6_i32 : i32 to index
    %c0_47 = arith.constant 0 : index
    %c0_48 = arith.constant 0 : index
    %297 = vector.load %arg1[%296, %c0_47, %c0_48] : memref<8x8x1xf32, #tpu.memory_space<vmem>>, vector<1x8x1xf32>
    %298 = vector.shape_cast %297 : vector<1x8x1xf32> to vector<8x1xf32>
    %299 = vector.broadcast %298 : vector<8x1xf32> to vector<8x128xf32>
    %300 = vector.broadcast %0 : vector<1x128xf32> to vector<8x128xf32>
    %301 = arith.mulf %299, %300 : vector<8x128xf32>
    %302 = vector.broadcast %1 : vector<1x128xf32> to vector<8x128xf32>
    %303 = arith.addf %301, %302 : vector<8x128xf32>
    %304 = arith.addf %303, %274 : vector<8x128xf32>
    %305 = vector.extract_strided_slice %304 {offsets = [0, 0], sizes = [8, 96], strides = [1, 1]} : vector<8x128xf32> to vector<8x96xf32>
    %306 = arith.negf %305 : vector<8x96xf32>
    %307 = math.exp %306 : vector<8x96xf32>
    %cst_49 = arith.constant 1.000000e+00 : f32
    %308 = vector.broadcast %cst_49 : f32 to vector<8x96xf32>
    %309 = arith.addf %308, %307 : vector<8x96xf32>
    %310 = arith.divf %308, %309 : vector<8x96xf32>
    %311 = vector.extract_strided_slice %304 {offsets = [0, 96], sizes = [8, 32], strides = [1, 1]} : vector<8x128xf32> to vector<8x32xf32>
    %312 = math.tanh %311 : vector<8x32xf32>
    %313 = vector.extract_strided_slice %310 {offsets = [0, 32], sizes = [8, 32], strides = [1, 1]} : vector<8x96xf32> to vector<8x32xf32>
    %314 = arith.mulf %313, %269 : vector<8x32xf32>
    %315 = vector.extract_strided_slice %310 {offsets = [0, 0], sizes = [8, 32], strides = [1, 1]} : vector<8x96xf32> to vector<8x32xf32>
    %316 = arith.mulf %315, %312 : vector<8x32xf32>
    %317 = arith.addf %314, %316 : vector<8x32xf32>
    %318 = vector.extract_strided_slice %310 {offsets = [0, 64], sizes = [8, 32], strides = [1, 1]} : vector<8x96xf32> to vector<8x32xf32>
    %319 = math.tanh %317 : vector<8x32xf32>
    %320 = arith.mulf %318, %319 : vector<8x32xf32>
    %cst_50 = arith.constant dense<0.000000e+00> : vector<8x256xf32>
    %321 = tpu.matmul %320, %2, %cst_50 {dimension_numbers = #tpu.dot_dimension_numbers<[1], [0], [0], [1], [0, 0, 1, 1], [], []>} : vector<8x32xf32>, vector<32x256xf32>, vector<8x256xf32> -> vector<8x256xf32>
    %322 = vector.extract_strided_slice %321 {offsets = [0, 0], sizes = [8, 128], strides = [1, 1]} : vector<8x256xf32> to vector<8x128xf32>
    %323 = vector.extract_strided_slice %321 {offsets = [0, 128], sizes = [8, 128], strides = [1, 1]} : vector<8x256xf32> to vector<8x128xf32>
    %324 = arith.addf %323, %295 : vector<8x128xf32>
    %325 = vector.broadcast %4 : vector<1x128xf32> to vector<8x128xf32>
    %326 = arith.addf %324, %325 : vector<8x128xf32>
    %327 = vector.extract_strided_slice %326 {offsets = [0, 0], sizes = [8, 96], strides = [1, 1]} : vector<8x128xf32> to vector<8x96xf32>
    %328 = arith.negf %327 : vector<8x96xf32>
    %329 = math.exp %328 : vector<8x96xf32>
    %cst_51 = arith.constant 1.000000e+00 : f32
    %330 = vector.broadcast %cst_51 : f32 to vector<8x96xf32>
    %331 = arith.addf %330, %329 : vector<8x96xf32>
    %332 = arith.divf %330, %331 : vector<8x96xf32>
    %333 = vector.extract_strided_slice %326 {offsets = [0, 96], sizes = [8, 32], strides = [1, 1]} : vector<8x128xf32> to vector<8x32xf32>
    %334 = math.tanh %333 : vector<8x32xf32>
    %335 = vector.extract_strided_slice %332 {offsets = [0, 32], sizes = [8, 32], strides = [1, 1]} : vector<8x96xf32> to vector<8x32xf32>
    %336 = arith.mulf %335, %291 : vector<8x32xf32>
    %337 = vector.extract_strided_slice %332 {offsets = [0, 0], sizes = [8, 32], strides = [1, 1]} : vector<8x96xf32> to vector<8x32xf32>
    %338 = arith.mulf %337, %334 : vector<8x32xf32>
    %339 = arith.addf %336, %338 : vector<8x32xf32>
    %340 = vector.extract_strided_slice %332 {offsets = [0, 64], sizes = [8, 32], strides = [1, 1]} : vector<8x96xf32> to vector<8x32xf32>
    %341 = math.tanh %339 : vector<8x32xf32>
    %342 = arith.mulf %340, %341 : vector<8x32xf32>
    %c7_i32 = arith.constant 7 : i32
    %cst_52 = arith.constant dense<0.000000e+00> : vector<8x128xf32>
    %343 = tpu.matmul %342, %3, %cst_52 {dimension_numbers = #tpu.dot_dimension_numbers<[1], [0], [0], [1], [0, 0, 1, 1], [], []>} : vector<8x32xf32>, vector<32x128xf32>, vector<8x128xf32> -> vector<8x128xf32>
    %344 = arith.index_cast %c7_i32 : i32 to index
    %c0_53 = arith.constant 0 : index
    %c0_54 = arith.constant 0 : index
    %345 = vector.load %arg1[%344, %c0_53, %c0_54] : memref<8x8x1xf32, #tpu.memory_space<vmem>>, vector<1x8x1xf32>
    %346 = vector.shape_cast %345 : vector<1x8x1xf32> to vector<8x1xf32>
    %347 = vector.broadcast %346 : vector<8x1xf32> to vector<8x128xf32>
    %348 = vector.broadcast %0 : vector<1x128xf32> to vector<8x128xf32>
    %349 = arith.mulf %347, %348 : vector<8x128xf32>
    %350 = vector.broadcast %1 : vector<1x128xf32> to vector<8x128xf32>
    %351 = arith.addf %349, %350 : vector<8x128xf32>
    %352 = arith.addf %351, %322 : vector<8x128xf32>
    %353 = vector.extract_strided_slice %352 {offsets = [0, 0], sizes = [8, 96], strides = [1, 1]} : vector<8x128xf32> to vector<8x96xf32>
    %354 = arith.negf %353 : vector<8x96xf32>
    %355 = math.exp %354 : vector<8x96xf32>
    %cst_55 = arith.constant 1.000000e+00 : f32
    %356 = vector.broadcast %cst_55 : f32 to vector<8x96xf32>
    %357 = arith.addf %356, %355 : vector<8x96xf32>
    %358 = arith.divf %356, %357 : vector<8x96xf32>
    %359 = vector.extract_strided_slice %352 {offsets = [0, 96], sizes = [8, 32], strides = [1, 1]} : vector<8x128xf32> to vector<8x32xf32>
    %360 = math.tanh %359 : vector<8x32xf32>
    %361 = vector.extract_strided_slice %358 {offsets = [0, 32], sizes = [8, 32], strides = [1, 1]} : vector<8x96xf32> to vector<8x32xf32>
    %362 = arith.mulf %361, %317 : vector<8x32xf32>
    %363 = vector.extract_strided_slice %358 {offsets = [0, 0], sizes = [8, 32], strides = [1, 1]} : vector<8x96xf32> to vector<8x32xf32>
    %364 = arith.mulf %363, %360 : vector<8x32xf32>
    %365 = arith.addf %362, %364 : vector<8x32xf32>
    %366 = vector.extract_strided_slice %358 {offsets = [0, 64], sizes = [8, 32], strides = [1, 1]} : vector<8x96xf32> to vector<8x32xf32>
    %367 = math.tanh %365 : vector<8x32xf32>
    %368 = arith.mulf %366, %367 : vector<8x32xf32>
    %cst_56 = arith.constant dense<0.000000e+00> : vector<8x256xf32>
    %369 = tpu.matmul %368, %2, %cst_56 {dimension_numbers = #tpu.dot_dimension_numbers<[1], [0], [0], [1], [0, 0, 1, 1], [], []>} : vector<8x32xf32>, vector<32x256xf32>, vector<8x256xf32> -> vector<8x256xf32>
    %370 = vector.extract_strided_slice %369 {offsets = [0, 0], sizes = [8, 128], strides = [1, 1]} : vector<8x256xf32> to vector<8x128xf32>
    %371 = vector.extract_strided_slice %369 {offsets = [0, 128], sizes = [8, 128], strides = [1, 1]} : vector<8x256xf32> to vector<8x128xf32>
    %372 = arith.addf %371, %343 : vector<8x128xf32>
    %373 = vector.broadcast %4 : vector<1x128xf32> to vector<8x128xf32>
    %374 = arith.addf %372, %373 : vector<8x128xf32>
    %375 = vector.extract_strided_slice %374 {offsets = [0, 0], sizes = [8, 96], strides = [1, 1]} : vector<8x128xf32> to vector<8x96xf32>
    %376 = arith.negf %375 : vector<8x96xf32>
    %377 = math.exp %376 : vector<8x96xf32>
    %cst_57 = arith.constant 1.000000e+00 : f32
    %378 = vector.broadcast %cst_57 : f32 to vector<8x96xf32>
    %379 = arith.addf %378, %377 : vector<8x96xf32>
    %380 = arith.divf %378, %379 : vector<8x96xf32>
    %381 = vector.extract_strided_slice %374 {offsets = [0, 96], sizes = [8, 32], strides = [1, 1]} : vector<8x128xf32> to vector<8x32xf32>
    %382 = math.tanh %381 : vector<8x32xf32>
    %383 = vector.extract_strided_slice %380 {offsets = [0, 32], sizes = [8, 32], strides = [1, 1]} : vector<8x96xf32> to vector<8x32xf32>
    %384 = arith.mulf %383, %339 : vector<8x32xf32>
    %385 = vector.extract_strided_slice %380 {offsets = [0, 0], sizes = [8, 32], strides = [1, 1]} : vector<8x96xf32> to vector<8x32xf32>
    %386 = arith.mulf %385, %382 : vector<8x32xf32>
    %387 = arith.addf %384, %386 : vector<8x32xf32>
    %388 = vector.extract_strided_slice %380 {offsets = [0, 64], sizes = [8, 32], strides = [1, 1]} : vector<8x96xf32> to vector<8x32xf32>
    %389 = math.tanh %387 : vector<8x32xf32>
    %390 = arith.mulf %388, %389 : vector<8x32xf32>
    %c8_i32 = arith.constant 8 : i32
    %c0_58 = arith.constant 0 : index
    %c0_59 = arith.constant 0 : index
    %391 = vector.load %arg7[%c0_58, %c0_59] : memref<1x32xf32, #tpu.memory_space<vmem>>, vector<1x32xf32>
    %392 = vector.broadcast %391 : vector<1x32xf32> to vector<8x32xf32>
    %393 = arith.mulf %390, %392 : vector<8x32xf32>
    %cst_60 = arith.constant dense<0.000000e+00> : vector<8xf32>
    %394 = vector.multi_reduction <add>, %393, %cst_60 [1] : vector<8x32xf32> to vector<8xf32>
    %395 = vector.shape_cast %394 : vector<8xf32> to vector<8x1xf32>
    %c0_61 = arith.constant 0 : index
    %c0_62 = arith.constant 0 : index
    %396 = vector.load %arg8[%c0_61, %c0_62] : memref<1x1xf32, #tpu.memory_space<vmem>>, vector<1x1xf32>
    %397 = vector.broadcast %396 : vector<1x1xf32> to vector<8x1xf32>
    %398 = arith.addf %395, %397 : vector<8x1xf32>
    %c0_63 = arith.constant 0 : index
    %c0_64 = arith.constant 0 : index
    %399 = vector.load %arg9[%c0_63, %c0_64] : memref<8x1xf32, #tpu.memory_space<vmem>>, vector<8x1xf32>
    tpu.vector_store %arg9[%c0_63, %c0_64], %398 {strides = array<i32>} : memref<8x1xf32, #tpu.memory_space<vmem>>, vector<8x1xf32>,
    return
  }
  func.func @transform_0(%arg0: i32) -> (i32, i32, i32) {
    %c0_i32 = arith.constant 0 : i32
    %c0_i32_0 = arith.constant 0 : i32
    %c0_i32_1 = arith.constant 0 : i32
    return %c0_i32, %arg0, %c0_i32_0 : i32, i32, i32
  }
  func.func @transform_1(%arg0: i32) -> (i32, i32) {
    %c0_i32 = arith.constant 0 : i32
    %c0_i32_0 = arith.constant 0 : i32
    %c0_i32_1 = arith.constant 0 : i32
    return %c0_i32, %c0_i32_0 : i32, i32
  }
  func.func @transform_2(%arg0: i32) -> (i32, i32) {
    %c0_i32 = arith.constant 0 : i32
    %c0_i32_0 = arith.constant 0 : i32
    %c0_i32_1 = arith.constant 0 : i32
    return %c0_i32, %c0_i32_0 : i32, i32
  }
  func.func @transform_3(%arg0: i32) -> (i32, i32) {
    %c0_i32 = arith.constant 0 : i32
    %c0_i32_0 = arith.constant 0 : i32
    %c0_i32_1 = arith.constant 0 : i32
    return %c0_i32, %c0_i32_0 : i32, i32
  }
  func.func @transform_4(%arg0: i32) -> (i32, i32) {
    %c0_i32 = arith.constant 0 : i32
    %c0_i32_0 = arith.constant 0 : i32
    %c0_i32_1 = arith.constant 0 : i32
    return %c0_i32, %c0_i32_0 : i32, i32
  }
  func.func @transform_5(%arg0: i32) -> (i32, i32) {
    %c0_i32 = arith.constant 0 : i32
    %c0_i32_0 = arith.constant 0 : i32
    %c0_i32_1 = arith.constant 0 : i32
    return %c0_i32, %c0_i32_0 : i32, i32
  }
  func.func @transform_6(%arg0: i32) -> (i32, i32) {
    %c0_i32 = arith.constant 0 : i32
    %c0_i32_0 = arith.constant 0 : i32
    %c0_i32_1 = arith.constant 0 : i32
    return %c0_i32, %c0_i32_0 : i32, i32
  }
  func.func @transform_7(%arg0: i32) -> (i32, i32) {
    %c0_i32 = arith.constant 0 : i32
    %c0_i32_0 = arith.constant 0 : i32
    %c0_i32_1 = arith.constant 0 : i32
    return %c0_i32, %c0_i32_0 : i32, i32
  }
  func.func @transform_8(%arg0: i32) -> (i32, i32) {
    %c0_i32 = arith.constant 0 : i32
    %c0_i32_0 = arith.constant 0 : i32
    return %arg0, %c0_i32 : i32, i32
  }
}

</mosaic_0001>

<llo_original>
// kernel: tpu_custom_call.1
$region0: #{tpu_custom_call.1}
  #allocation0 [shape = 'u32[]', space=smem, size = 0x4, offset = 0x4, fixed_abs, tag = 'smem constant byte address 0x4 - core index']
  #allocation1 [shape = 'u32[144,128]{1,0:T(1,128)}', space=vmem, size = 0x12000, scoped, tag = 'internal scratch']
  #allocation2 [shape = 'f32[1,1]{1,0:T(1,128)S(1)}', space=vmem, size = 0x200, scoped, tag = 'scoped memory for tpu_custom_call.1']
  %s0 = inlined_call_operand.vmem [shape: f32[8,8,1], index: 0, kind: input, shape index: {}]
  %s1 = inlined_call_operand.vmem [shape: f32[1,128], index: 1, kind: input, shape index: {}]
  %s2 = inlined_call_operand.vmem [shape: f32[1,128], index: 2, kind: input, shape index: {}]
  %s3 = inlined_call_operand.vmem [shape: f32[32,256], index: 3, kind: input, shape index: {}]
  %s4 = inlined_call_operand.hbm [shape: f32[32,128], index: 4, kind: input, shape index: {}]
  %s5 = inlined_call_operand.vmem [shape: f32[1,128], index: 5, kind: input, shape index: {}]
  %s6 = inlined_call_operand.vmem [shape: f32[1,32], index: 6, kind: input, shape index: {}]
  %s7 = inlined_call_operand.<no memory space> [shape: f32[1,1], index: 7, kind: input, shape index: {}]
  %s8 = inlined_call_operand.vmem [shape: f32[8,1], index: 8, kind: output, shape index: {}]
  %s9 = sld [smem:[#allocation0]]
  $region46: #{tpu_custom_call.1} parent=0
    _
  %s11 = ssub.s32 1, %s9
  %s12 = scalar_select 0, %s11, %s9
  %v13 = vstv %s7
  %14 = vst [vmem:[#allocation2] sm:$0x1] %v13
  $region1: #{tpu_custom_call.1} parent=0
    #allocation3 [shape = 'u8[16384]{0}', space=vmem, size = 0x4000, scoped, tag = 'input window, operand 4, single buffered']
    #allocation4 [shape = 's32[1]{0}', space=sflag, size = 0x4, scoped, tag = 'scoped memory for tpu_custom_call.1']
    %15 = vsyncpa [#allocation4], 0
    // Predicated region
    $region2: #{tpu_custom_call.1} parent=1 // pred_check
      _
    $region3: #{tpu_custom_call.1} parent=1 // pred_check_branch
      %17 = sbr.rel (0) target = $region5
    $region4: #{tpu_custom_call.1} parent=1 // pred_region
      _
    $region5: #{tpu_custom_call.1} parent=1 // pred_fallthru
      _
    // Predicated region
    $region6: #{tpu_custom_call.1} parent=1 // pred_check
      _
    $region7: #{tpu_custom_call.1} parent=1 // pred_check_branch
      %19 = sbr.rel (0) target = $region9
    $region8: #{tpu_custom_call.1} parent=1 // pred_region
      _
    $region9: #{tpu_custom_call.1} parent=1 // pred_fallthru
      _
    // Predicated region
    $region10: #{tpu_custom_call.1} parent=1 // pred_check
      _
    $region11: #{tpu_custom_call.1} parent=1 // pred_check_branch
      %21 = sbr.rel (0) target = $region13
    $region12: #{tpu_custom_call.1} parent=1 // pred_region
      _
    $region13: #{tpu_custom_call.1} parent=1 // pred_fallthru
      _
    // Predicated region
    $region14: #{tpu_custom_call.1} parent=1 // pred_check
      _
    $region15: #{tpu_custom_call.1} parent=1 // pred_check_branch
      %23 = sbr.rel (0) target = $region17
    $region16: #{tpu_custom_call.1} parent=1 // pred_region
      _
    $region17: #{tpu_custom_call.1} parent=1 // pred_fallthru
      _
    // Predicated region
    $region18: #{tpu_custom_call.1} parent=1 // pred_check
      _
    $region19: #{tpu_custom_call.1} parent=1 // pred_check_branch
      %25 = sbr.rel (0) target = $region21
    $region20: #{tpu_custom_call.1} parent=1 // pred_region
      %s27 = ssub.s32 512, 512
      %28 = vsyncadd [#allocation4], %s27
      %s29 = sshll.u32 [#allocation3], 4
      %s30 = int_to_ptr.vmem [resolvable:$true] %s29
      %35 = dma.hbm_to_vmem [thread:$0]  %s4, 512, %s30, [#allocation4], 128, 128, 8
    $region21: #{tpu_custom_call.1} parent=1 // pred_fallthru
      _
    // Predicated region
    $region22: #{tpu_custom_call.1} parent=1 // pred_check
      _
    $region23: #{tpu_custom_call.1} parent=1 // pred_check_branch
      %37 = sbr.rel (0) target = $region25
    $region24: #{tpu_custom_call.1} parent=1 // pred_region
      _
    $region25: #{tpu_custom_call.1} parent=1 // pred_fallthru
      _
    // Predicated region
    $region26: #{tpu_custom_call.1} parent=1 // pred_check
      _
    $region27: #{tpu_custom_call.1} parent=1 // pred_check_branch
      %39 = sbr.rel (0) target = $region29
    $region28: #{tpu_custom_call.1} parent=1 // pred_region
      _
    $region29: #{tpu_custom_call.1} parent=1 // pred_fallthru
      _
    // Predicated region
    $region30: #{tpu_custom_call.1} parent=1 // pred_check
      _
    $region31: #{tpu_custom_call.1} parent=1 // pred_check_branch
      %41 = sbr.rel (0) target = $region33
    $region32: #{tpu_custom_call.1} parent=1 // pred_region
      _
    $region33: #{tpu_custom_call.1} parent=1 // pred_fallthru
      _
    // Predicated region
    $region34: #{tpu_custom_call.1} parent=1 // pred_check
      _
    $region35: #{tpu_custom_call.1} parent=1 // pred_check_branch
      %43 = sbr.rel (0) target = $region37
    $region36: #{tpu_custom_call.1} parent=1 // pred_region
      %44 = dma.done [#allocation4], 512
    $region37: #{tpu_custom_call.1} parent=1 // pred_fallthru
      _
    %v45 = vld [vmem:[%s1] sm:$0x1]
    %v46 = vld [vmem:[%s2] sm:$0x1]
    %v47 = vld [vmem:[%s3] sm:$0xff]
    %v48 = vld [vmem:[%s3 + $0x8] sm:$0xff]
    %v49 = vld [vmem:[%s3 + $0x10] sm:$0xff]
    %v50 = vld [vmem:[%s3 + $0x18] sm:$0xff]
    %v51 = vld [vmem:[%s3 + $0x20] sm:$0xff]
    %v52 = vld [vmem:[%s3 + $0x28] sm:$0xff]
    %v53 = vld [vmem:[%s3 + $0x30] sm:$0xff]
    %v54 = vld [vmem:[%s3 + $0x38] sm:$0xff]
    %v55 = vld [vmem:[#allocation3] sm:$0xff]
    %v56 = vld [vmem:[#allocation3 + $0x8] sm:$0xff]
    %v57 = vld [vmem:[#allocation3 + $0x10] sm:$0xff]
    %v58 = vld [vmem:[#allocation3 + $0x18] sm:$0xff]
    %v59 = vld [vmem:[%s5] sm:$0x1]
    %vm60 = vcmask 261120
    %v62 = vsel %vm60, 0.0, 0
    %64 = vmatprep.subr.mxu0 0.0
    %65 = vmatpush1.msra.mxu0 %v55
    %66 = vmatprep.subr.mxu0 0.0
    %67 = vmatpush1.msra.mxu0 %v56
    %68 = vmatprep.subr.mxu0 0.0
    %69 = vmatpush1.msra.mxu0 %v57
    %70 = vmatprep.subr.mxu0 0.0
    %71 = vmatpush1.msra.mxu0 %v58
    %72 = vmatprep.subr.mxu0 0.0
    %73 = vmatpush1.msra.mxu0 0.0
    %74 = vmatprep.subr.mxu0 0.0
    %75 = vmatpush1.msra.mxu0 0.0
    %76 = vmatprep.subr.mxu0 0.0
    %77 = vmatpush1.msra.mxu0 0.0
    %78 = vmatprep.subr.mxu0 0.0
    %79 = vmatpush1.msra.mxu0 0.0
    %80 = vmatprep.subr.mxu0 0.0
    %81 = vmatpush1.msra.mxu0 0.0
    %82 = vmatprep.subr.mxu0 0.0
    %83 = vmatpush1.msra.mxu0 0.0
    %84 = vmatprep.subr.mxu0 0.0
    %85 = vmatpush1.msra.mxu0 0.0
    %86 = vmatprep.subr.mxu0 0.0
    %87 = vmatpush1.msra.mxu0 0.0
    %88 = vmatprep.subr.mxu0 0.0
    %89 = vmatpush1.msra.mxu0 0.0
    %90 = vmatprep.subr.mxu0 0.0
    %91 = vmatpush1.msra.mxu0 0.0
    %92 = vmatprep.subr.mxu0 0.0
    %93 = vmatpush1.msra.mxu0 0.0
    %94 = vmatprep.subr.mxu0 0.0
    %95 = vmatpush1.msra.mxu0 0.0
    %96 = vmatprep.subr.mxu0 0.0
    %97 = vmatpush1.msra.mxu0 0.0
    %98 = vmatprep.subr.mxu0 0.0
    %99 = vmatpush1.msra.mxu0 0.0
    %100 = vmatprep.subr.mxu0 0.0
    %101 = vmatpush1.msra.mxu0 0.0
    %102 = vmatprep.subr.mxu0 0.0
    %103 = vmatpush1.msra.mxu0 0.0
    %104 = vmatprep.subr.mxu0 0.0
    %105 = vmatpush1.msra.mxu0 0.0
    %106 = vmatprep.subr.mxu0 0.0
    %107 = vmatpush1.msra.mxu0 0.0
    %108 = vmatprep.subr.mxu0 0.0
    %109 = vmatpush1.msra.mxu0 0.0
    %110 = vmatprep.subr.mxu0 0.0
    %111 = vmatpush1.msra.mxu0 0.0
    %112 = vmatprep.subr.mxu0 0.0
    %113 = vmatpush1.msra.mxu0 0.0
    %114 = vmatprep.subr.mxu0 0.0
    %115 = vmatpush1.msra.mxu0 0.0
    %116 = vmatprep.subr.mxu0 0.0
    %117 = vmatpush1.msra.mxu0 0.0
    %118 = vmatprep.subr.mxu0 0.0
    %119 = vmatpush1.msra.mxu0 0.0
    %120 = vmatprep.subr.mxu0 0.0
    %121 = vmatpush1.msra.mxu0 0.0
    %122 = vmatprep.subr.mxu0 0.0
    %123 = vmatpush1.msra.mxu0 0.0
    %124 = vmatprep.subr.mxu0 0.0
    %125 = vmatpush1.msra.mxu0 0.0
    %126 = vmatprep.subr.mxu0 0.0
    %127 = vmatpush1.msra.mxu0 0.0
    %128 = vmatprep.mubr.f32.mxu0 0.0
    %129 = vmatmul.mubr.f32.gmra.mrb[0].mxu0 %v62
    %v130 = vpop.f32.mrb[0].mxu0
    %v131 = vadd.f32 0.0, %v130
    %v132 = vpop.f32.mrb[0].mxu0
    %133 = vdwg.mxu0
    %v134 = vld [vmem:[%s0] sm:$0xff]
    %136 = vset.pattern.permute.xlu0 0
    %137 = vperm.xlu0 %136, %v134
    %v138 = vpop.permute.xlu0 %137
    %v141 = vlaneseq
    %v142 = vshrl.u32 %v141, 7
    %v143 = vsub.s32 0, %v142
    %v144 = vrot.slane %v45, %v143
    %v146 = vmul.f32 %v138, %v144
    %v148 = vlaneseq
    %v149 = vshrl.u32 %v148, 7
    %v150 = vsub.s32 0, %v149
    %v151 = vrot.slane %v46, %v150
    %v153 = vadd.f32 %v146, %v151
    %v154 = vadd.f32 %v153, 0.0
    %v155 = vxor.u32 %v154, 2147483648
    %v156 = vmul.f32 %v155, 1.442695
    %v157 = vpow.pop %v156
    %v158 = vadd.f32 %v157, 1.0
    %v159 = vrcp.pop %v158
    %v160 = vmul.f32 1.0, %v159
    %v161 = vtanh.pop %v154
    %v162 = vmul.f32 %v160, 0.0
    %164 = vrot.lane.b32.xlu0 %v161, 32
    %v165 = vpop.permute.xlu0 %164
    %v167 = vmul.f32 %v160, %v165
    %169 = vrot.lane.b32.xlu0 %v167, 32
    %v170 = vpop.permute.xlu0 %169
    %v172 = vadd.f32 %v162, %v170
    %v173 = vtanh.pop %v172
    %175 = vrot.lane.b32.xlu0 %v173, 32
    %v176 = vpop.permute.xlu0 %175
    %v178 = vmul.f32 %v160, %v176
    %180 = vrot.lane.b32.xlu0 %v178, 64
    %v181 = vpop.permute.xlu0 %180
    %v182 = vsel %vm60, %v181, 0
    %184 = vmatprep.subr.mxu0 %v48
    %185 = vmatpush1.msra.mxu0 %v47
    %186 = vmatprep.subr.mxu0 %v50
    %187 = vmatpush1.msra.mxu0 %v49
    %188 = vmatprep.subr.mxu0 %v52
    %189 = vmatpush1.msra.mxu0 %v51
    %190 = vmatprep.subr.mxu0 %v54
    %191 = vmatpush1.msra.mxu0 %v53
    %192 = vmatprep.subr.mxu0 0.0
    %193 = vmatpush1.msra.mxu0 0.0
    %194 = vmatprep.subr.mxu0 0.0
    %195 = vmatpush1.msra.mxu0 0.0
    %196 = vmatprep.subr.mxu0 0.0
    %197 = vmatpush1.msra.mxu0 0.0
    %198 = vmatprep.subr.mxu0 0.0
    %199 = vmatpush1.msra.mxu0 0.0
    %200 = vmatprep.subr.mxu0 0.0
    %201 = vmatpush1.msra.mxu0 0.0
    %202 = vmatprep.subr.mxu0 0.0
    %203 = vmatpush1.msra.mxu0 0.0
    %204 = vmatprep.subr.mxu0 0.0
    %205 = vmatpush1.msra.mxu0 0.0
    %206 = vmatprep.subr.mxu0 0.0
    %207 = vmatpush1.msra.mxu0 0.0
    %208 = vmatprep.subr.mxu0 0.0
    %209 = vmatpush1.msra.mxu0 0.0
    %210 = vmatprep.subr.mxu0 0.0
    %211 = vmatpush1.msra.mxu0 0.0
    %212 = vmatprep.subr.mxu0 0.0
    %213 = vmatpush1.msra.mxu0 0.0
    %214 = vmatprep.subr.mxu0 0.0
    %215 = vmatpush1.msra.mxu0 0.0
    %216 = vmatprep.subr.mxu0 0.0
    %217 = vmatpush1.msra.mxu0 0.0
    %218 = vmatprep.subr.mxu0 0.0
    %219 = vmatpush1.msra.mxu0 0.0
    %220 = vmatprep.subr.mxu0 0.0
    %221 = vmatpush1.msra.mxu0 0.0
    %222 = vmatprep.subr.mxu0 0.0
    %223 = vmatpush1.msra.mxu0 0.0
    %224 = vmatprep.subr.mxu0 0.0
    %225 = vmatpush1.msra.mxu0 0.0
    %226 = vmatprep.subr.mxu0 0.0
    %227 = vmatpush1.msra.mxu0 0.0
    %228 = vmatprep.subr.mxu0 0.0
    %229 = vmatpush1.msra.mxu0 0.0
    %230 = vmatprep.subr.mxu0 0.0
    %231 = vmatpush1.msra.mxu0 0.0
    %232 = vmatprep.subr.mxu0 0.0
    %233 = vmatpush1.msra.mxu0 0.0
    %234 = vmatprep.subr.mxu0 0.0
    %235 = vmatpush1.msra.mxu0 0.0
    %236 = vmatprep.subr.mxu0 0.0
    %237 = vmatpush1.msra.mxu0 0.0
    %238 = vmatprep.subr.mxu0 0.0
    %239 = vmatpush1.msra.mxu0 0.0
    %240 = vmatprep.subr.mxu0 0.0
    %241 = vmatpush1.msra.mxu0 0.0
    %242 = vmatprep.subr.mxu0 0.0
    %243 = vmatpush1.msra.mxu0 0.0
    %244 = vmatprep.subr.mxu0 0.0
    %245 = vmatpush1.msra.mxu0 0.0
    %246 = vmatprep.subr.mxu0 0.0
    %247 = vmatpush1.msra.mxu0 0.0
    %248 = vmatprep.mubr.f32.mxu0 0.0
    %249 = vmatmul.mubr.f32.gmra.mrb[0].mxu0 %v182
    %v250 = vpop.f32.mrb[0].mxu0
    %v251 = vadd.f32 0.0, %v250
    %v252 = vpop.f32.mrb[0].mxu0
    %v253 = vadd.f32 0.0, %v252
    %254 = vdwg.mxu0
    %v255 = vadd.f32 %v253, %v131
    %v257 = vlaneseq
    %v258 = vshrl.u32 %v257, 7
    %v259 = vsub.s32 0, %v258
    %v260 = vrot.slane %v59, %v259
    %v262 = vadd.f32 %v255, %v260
    %v263 = vxor.u32 %v262, 2147483648
    %v264 = vmul.f32 %v263, 1.442695
    %v265 = vpow.pop %v264
    %v266 = vadd.f32 %v265, 1.0
    %v267 = vrcp.pop %v266
    %v268 = vmul.f32 1.0, %v267
    %v269 = vtanh.pop %v262
    %v270 = vmul.f32 %v268, 0.0
    %272 = vrot.lane.b32.xlu0 %v269, 32
    %v273 = vpop.permute.xlu0 %272
    %v275 = vmul.f32 %v268, %v273
    %277 = vrot.lane.b32.xlu0 %v275, 32
    %v278 = vpop.permute.xlu0 %277
    %v280 = vadd.f32 %v270, %v278
    %v281 = vtanh.pop %v280
    %283 = vrot.lane.b32.xlu0 %v281, 32
    %v284 = vpop.permute.xlu0 %283
    %v286 = vmul.f32 %v268, %v284
    %288 = vrot.lane.b32.xlu0 %v286, 64
    %v289 = vpop.permute.xlu0 %288
    %v290 = vsel %vm60, %v289, 0
    %292 = vmatprep.subr.mxu0 0.0
    %293 = vmatpush1.msra.mxu0 %v55
    %294 = vmatprep.subr.mxu0 0.0
    %295 = vmatpush1.msra.mxu0 %v56
    %296 = vmatprep.subr.mxu0 0.0
    %297 = vmatpush1.msra.mxu0 %v57
    %298 = vmatprep.subr.mxu0 0.0
    %299 = vmatpush1.msra.mxu0 %v58
    %300 = vmatprep.subr.mxu0 0.0
    %301 = vmatpush1.msra.mxu0 0.0
    %302 = vmatprep.subr.mxu0 0.0
    %303 = vmatpush1.msra.mxu0 0.0
    %304 = vmatprep.subr.mxu0 0.0
    %305 = vmatpush1.msra.mxu0 0.0
    %306 = vmatprep.subr.mxu0 0.0
    %307 = vmatpush1.msra.mxu0 0.0
    %308 = vmatprep.subr.mxu0 0.0
    %309 = vmatpush1.msra.mxu0 0.0
    %310 = vmatprep.subr.mxu0 0.0
    %311 = vmatpush1.msra.mxu0 0.0
    %312 = vmatprep.subr.mxu0 0.0
    %313 = vmatpush1.msra.mxu0 0.0
    %314 = vmatprep.subr.mxu0 0.0
    %315 = vmatpush1.msra.mxu0 0.0
    %316 = vmatprep.subr.mxu0 0.0
    %317 = vmatpush1.msra.mxu0 0.0
    %318 = vmatprep.subr.mxu0 0.0
    %319 = vmatpush1.msra.mxu0 0.0
    %320 = vmatprep.subr.mxu0 0.0
    %321 = vmatpush1.msra.mxu0 0.0
    %322 = vmatprep.subr.mxu0 0.0
    %323 = vmatpush1.msra.mxu0 0.0
    %324 = vmatprep.subr.mxu0 0.0
    %325 = vmatpush1.msra.mxu0 0.0
    %326 = vmatprep.subr.mxu0 0.0
    %327 = vmatpush1.msra.mxu0 0.0
    %328 = vmatprep.subr.mxu0 0.0
    %329 = vmatpush1.msra.mxu0 0.0
    %330 = vmatprep.subr.mxu0 0.0
    %331 = vmatpush1.msra.mxu0 0.0
    %332 = vmatprep.subr.mxu0 0.0
    %333 = vmatpush1.msra.mxu0 0.0
    %334 = vmatprep.subr.mxu0 0.0
    %335 = vmatpush1.msra.mxu0 0.0
    %336 = vmatprep.subr.mxu0 0.0
    %337 = vmatpush1.msra.mxu0 0.0
    %338 = vmatprep.subr.mxu0 0.0
    %339 = vmatpush1.msra.mxu0 0.0
    %340 = vmatprep.subr.mxu0 0.0
    %341 = vmatpush1.msra.mxu0 0.0
    %342 = vmatprep.subr.mxu0 0.0
    %343 = vmatpush1.msra.mxu0 0.0
    %344 = vmatprep.subr.mxu0 0.0
    %345 = vmatpush1.msra.mxu0 0.0
    %346 = vmatprep.subr.mxu0 0.0
    %347 = vmatpush1.msra.mxu0 0.0
    %348 = vmatprep.subr.mxu0 0.0
    %349 = vmatpush1.msra.mxu0 0.0
    %350 = vmatprep.subr.mxu0 0.0
    %351 = vmatpush1.msra.mxu0 0.0
    %352 = vmatprep.subr.mxu0 0.0
    %353 = vmatpush1.msra.mxu0 0.0
    %354 = vmatprep.subr.mxu0 0.0
    %355 = vmatpush1.msra.mxu0 0.0
    %356 = vmatprep.mubr.f32.mxu0 0.0
    %357 = vmatmul.mubr.f32.gmra.mrb[0].mxu0 %v290
    %v358 = vpop.f32.mrb[0].mxu0
    %v359 = vadd.f32 0.0, %v358
    %v360 = vpop.f32.mrb[0].mxu0
    %361 = vdwg.mxu0
    %s362 = scalar_lea.vmem %s0, 8
    %v363 = vld [vmem:[%s362] sm:$0xff]
    %365 = vset.pattern.permute.xlu0 0
    %366 = vperm.xlu0 %365, %v363
    %v367 = vpop.permute.xlu0 %366
    %v369 = vmul.f32 %v367, %v144
    %v370 = vadd.f32 %v369, %v151
    %v371 = vadd.f32 %v370, %v251
    %v372 = vxor.u32 %v371, 2147483648
    %v373 = vmul.f32 %v372, 1.442695
    %v374 = vpow.pop %v373
    %v375 = vadd.f32 %v374, 1.0
    %v376 = vrcp.pop %v375
    %v377 = vmul.f32 1.0, %v376
    %v378 = vtanh.pop %v371
    %v379 = vmul.f32 %v377, %v172
    %381 = vrot.lane.b32.xlu0 %v378, 32
    %v382 = vpop.permute.xlu0 %381
    %v384 = vmul.f32 %v377, %v382
    %386 = vrot.lane.b32.xlu0 %v384, 32
    %v387 = vpop.permute.xlu0 %386
    %v389 = vadd.f32 %v379, %v387
    %v390 = vtanh.pop %v389
    %392 = vrot.lane.b32.xlu0 %v390, 32
    %v393 = vpop.permute.xlu0 %392
    %v395 = vmul.f32 %v377, %v393
    %397 = vrot.lane.b32.xlu0 %v395, 64
    %v398 = vpop.permute.xlu0 %397
    %v399 = vsel %vm60, %v398, 0
    %401 = vmatprep.subr.mxu0 %v48
    %402 = vmatpush1.msra.mxu0 %v47
    %403 = vmatprep.subr.mxu0 %v50
    %404 = vmatpush1.msra.mxu0 %v49
    %405 = vmatprep.subr.mxu0 %v52
    %406 = vmatpush1.msra.mxu0 %v51
    %407 = vmatprep.subr.mxu0 %v54
    %408 = vmatpush1.msra.mxu0 %v53
    %409 = vmatprep.subr.mxu0 0.0
    %410 = vmatpush1.msra.mxu0 0.0
    %411 = vmatprep.subr.mxu0 0.0
    %412 = vmatpush1.msra.mxu0 0.0
    %413 = vmatprep.subr.mxu0 0.0
    %414 = vmatpush1.msra.mxu0 0.0
    %415 = vmatprep.subr.mxu0 0.0
    %416 = vmatpush1.msra.mxu0 0.0
    %417 = vmatprep.subr.mxu0 0.0
    %418 = vmatpush1.msra.mxu0 0.0
    %419 = vmatprep.subr.mxu0 0.0
    %420 = vmatpush1.msra.mxu0 0.0
    %421 = vmatprep.subr.mxu0 0.0
    %422 = vmatpush1.msra.mxu0 0.0
    %423 = vmatprep.subr.mxu0 0.0
    %424 = vmatpush1.msra.mxu0 0.0
    %425 = vmatprep.subr.mxu0 0.0
    %426 = vmatpush1.msra.mxu0 0.0
    %427 = vmatprep.subr.mxu0 0.0
    %428 = vmatpush1.msra.mxu0 0.0
    %429 = vmatprep.subr.mxu0 0.0
    %430 = vmatpush1.msra.mxu0 0.0
    %431 = vmatprep.subr.mxu0 0.0
    %432 = vmatpush1.msra.mxu0 0.0
    %433 = vmatprep.subr.mxu0 0.0
    %434 = vmatpush1.msra.mxu0 0.0
    %435 = vmatprep.subr.mxu0 0.0
    %436 = vmatpush1.msra.mxu0 0.0
    %437 = vmatprep.subr.mxu0 0.0
    %438 = vmatpush1.msra.mxu0 0.0
    %439 = vmatprep.subr.mxu0 0.0
    %440 = vmatpush1.msra.mxu0 0.0
    %441 = vmatprep.subr.mxu0 0.0
    %442 = vmatpush1.msra.mxu0 0.0
    %443 = vmatprep.subr.mxu0 0.0
    %444 = vmatpush1.msra.mxu0 0.0
    %445 = vmatprep.subr.mxu0 0.0
    %446 = vmatpush1.msra.mxu0 0.0
    %447 = vmatprep.subr.mxu0 0.0
    %448 = vmatpush1.msra.mxu0 0.0
    %449 = vmatprep.subr.mxu0 0.0
    %450 = vmatpush1.msra.mxu0 0.0
    %451 = vmatprep.subr.mxu0 0.0
    %452 = vmatpush1.msra.mxu0 0.0
    %453 = vmatprep.subr.mxu0 0.0
    %454 = vmatpush1.msra.mxu0 0.0
    %455 = vmatprep.subr.mxu0 0.0
    %456 = vmatpush1.msra.mxu0 0.0
    %457 = vmatprep.subr.mxu0 0.0
    %458 = vmatpush1.msra.mxu0 0.0
    %459 = vmatprep.subr.mxu0 0.0
    %460 = vmatpush1.msra.mxu0 0.0
    %461 = vmatprep.subr.mxu0 0.0
    %462 = vmatpush1.msra.mxu0 0.0
    %463 = vmatprep.subr.mxu0 0.0
    %464 = vmatpush1.msra.mxu0 0.0
    %465 = vmatprep.mubr.f32.mxu0 0.0
    %466 = vmatmul.mubr.f32.gmra.mrb[0].mxu0 %v399
    %v467 = vpop.f32.mrb[0].mxu0
    %v468 = vadd.f32 0.0, %v467
    %v469 = vpop.f32.mrb[0].mxu0
    %v470 = vadd.f32 0.0, %v469
    %471 = vdwg.mxu0
    %v472 = vadd.f32 %v470, %v359
    %v473 = vadd.f32 %v472, %v260
    %v474 = vxor.u32 %v473, 2147483648
    %v475 = vmul.f32 %v474, 1.442695
    %v476 = vpow.pop %v475
    %v477 = vadd.f32 %v476, 1.0
    %v478 = vrcp.pop %v477
    %v479 = vmul.f32 1.0, %v478
    %v480 = vtanh.pop %v473
    %v481 = vmul.f32 %v479, %v280
    %483 = vrot.lane.b32.xlu0 %v480, 32
    %v484 = vpop.permute.xlu0 %483
    %v486 = vmul.f32 %v479, %v484
    %488 = vrot.lane.b32.xlu0 %v486, 32
    %v489 = vpop.permute.xlu0 %488
    %v491 = vadd.f32 %v481, %v489
    %v492 = vtanh.pop %v491
    %494 = vrot.lane.b32.xlu0 %v492, 32
    %v495 = vpop.permute.xlu0 %494
    %v497 = vmul.f32 %v479, %v495
    %499 = vrot.lane.b32.xlu0 %v497, 64
    %v500 = vpop.permute.xlu0 %499
    %v501 = vsel %vm60, %v500, 0
    %503 = vmatprep.subr.mxu0 0.0
    %504 = vmatpush1.msra.mxu0 %v55
    %505 = vmatprep.subr.mxu0 0.0
    %506 = vmatpush1.msra.mxu0 %v56
    %507 = vmatprep.subr.mxu0 0.0
    %508 = vmatpush1.msra.mxu0 %v57
    %509 = vmatprep.subr.mxu0 0.0
    %510 = vmatpush1.msra.mxu0 %v58
    %511 = vmatprep.subr.mxu0 0.0
    %512 = vmatpush1.msra.mxu0 0.0
    %513 = vmatprep.subr.mxu0 0.0
    %514 = vmatpush1.msra.mxu0 0.0
    %515 = vmatprep.subr.mxu0 0.0
    %516 = vmatpush1.msra.mxu0 0.0
    %517 = vmatprep.subr.mxu0 0.0
    %518 = vmatpush1.msra.mxu0 0.0
    %519 = vmatprep.subr.mxu0 0.0
    %520 = vmatpush1.msra.mxu0 0.0
    %521 = vmatprep.subr.mxu0 0.0
    %522 = vmatpush1.msra.mxu0 0.0
    %523 = vmatprep.subr.mxu0 0.0
    %524 = vmatpush1.msra.mxu0 0.0
    %525 = vmatprep.subr.mxu0 0.0
    %526 = vmatpush1.msra.mxu0 0.0
    %527 = vmatprep.subr.mxu0 0.0
    %528 = vmatpush1.msra.mxu0 0.0
    %529 = vmatprep.subr.mxu0 0.0
    %530 = vmatpush1.msra.mxu0 0.0
    %531 = vmatprep.subr.mxu0 0.0
    %532 = vmatpush1.msra.mxu0 0.0
    %533 = vmatprep.subr.mxu0 0.0
    %534 = vmatpush1.msra.mxu0 0.0
    %535 = vmatprep.subr.mxu0 0.0
    %536 = vmatpush1.msra.mxu0 0.0
    %537 = vmatprep.subr.mxu0 0.0
    %538 = vmatpush1.msra.mxu0 0.0
    %539 = vmatprep.subr.mxu0 0.0
    %540 = vmatpush1.msra.mxu0 0.0
    %541 = vmatprep.subr.mxu0 0.0
    %542 = vmatpush1.msra.mxu0 0.0
    %543 = vmatprep.subr.mxu0 0.0
    %544 = vmatpush1.msra.mxu0 0.0
    %545 = vmatprep.subr.mxu0 0.0
    %546 = vmatpush1.msra.mxu0 0.0
    %547 = vmatprep.subr.mxu0 0.0
    %548 = vmatpush1.msra.mxu0 0.0
    %549 = vmatprep.subr.mxu0 0.0
    %550 = vmatpush1.msra.mxu0 0.0
    %551 = vmatprep.subr.mxu0 0.0
    %552 = vmatpush1.msra.mxu0 0.0
    %553 = vmatprep.subr.mxu0 0.0
    %554 = vmatpush1.msra.mxu0 0.0
    %555 = vmatprep.subr.mxu0 0.0
    %556 = vmatpush1.msra.mxu0 0.0
    %557 = vmatprep.subr.mxu0 0.0
    %558 = vmatpush1.msra.mxu0 0.0
    %559 = vmatprep.subr.mxu0 0.0
    %560 = vmatpush1.msra.mxu0 0.0
    %561 = vmatprep.subr.mxu0 0.0
    %562 = vmatpush1.msra.mxu0 0.0
    %563 = vmatprep.subr.mxu0 0.0
    %564 = vmatpush1.msra.mxu0 0.0
    %565 = vmatprep.subr.mxu0 0.0
    %566 = vmatpush1.msra.mxu0 0.0
    %567 = vmatprep.mubr.f32.mxu0 0.0
    %568 = vmatmul.mubr.f32.gmra.mrb[0].mxu0 %v501
    %v569 = vpop.f32.mrb[0].mxu0
    %v570 = vadd.f32 0.0, %v569
    %v571 = vpop.f32.mrb[0].mxu0
    %572 = vdwg.mxu0
    %s573 = scalar_lea.vmem %s0, 16
    %v574 = vld [vmem:[%s573] sm:$0xff]
    %576 = vset.pattern.permute.xlu0 0
    %577 = vperm.xlu0 %576, %v574
    %v578 = vpop.permute.xlu0 %577
    %v580 = vmul.f32 %v578, %v144
    %v581 = vadd.f32 %v580, %v151
    %v582 = vadd.f32 %v581, %v468
    %v583 = vxor.u32 %v582, 2147483648
    %v584 = vmul.f32 %v583, 1.442695
    %v585 = vpow.pop %v584
    %v586 = vadd.f32 %v585, 1.0
    %v587 = vrcp.pop %v586
    %v588 = vmul.f32 1.0, %v587
    %v589 = vtanh.pop %v582
    %v590 = vmul.f32 %v588, %v389
    %592 = vrot.lane.b32.xlu0 %v589, 32
    %v593 = vpop.permute.xlu0 %592
    %v595 = vmul.f32 %v588, %v593
    %597 = vrot.lane.b32.xlu0 %v595, 32
    %v598 = vpop.permute.xlu0 %597
    %v600 = vadd.f32 %v590, %v598
    %v601 = vtanh.pop %v600
    %603 = vrot.lane.b32.xlu0 %v601, 32
    %v604 = vpop.permute.xlu0 %603
    %v606 = vmul.f32 %v588, %v604
    %608 = vrot.lane.b32.xlu0 %v606, 64
    %v609 = vpop.permute.xlu0 %608
    %v610 = vsel %vm60, %v609, 0
    %612 = vmatprep.subr.mxu0 %v48
    %613 = vmatpush1.msra.mxu0 %v47
    %614 = vmatprep.subr.mxu0 %v50
    %615 = vmatpush1.msra.mxu0 %v49
    %616 = vmatprep.subr.mxu0 %v52
    %617 = vmatpush1.msra.mxu0 %v51
    %618 = vmatprep.subr.mxu0 %v54
    %619 = vmatpush1.msra.mxu0 %v53
    %620 = vmatprep.subr.mxu0 0.0
    %621 = vmatpush1.msra.mxu0 0.0
    %622 = vmatprep.subr.mxu0 0.0
    %623 = vmatpush1.msra.mxu0 0.0
    %624 = vmatprep.subr.mxu0 0.0
    %625 = vmatpush1.msra.mxu0 0.0
    %626 = vmatprep.subr.mxu0 0.0
    %627 = vmatpush1.msra.mxu0 0.0
    %628 = vmatprep.subr.mxu0 0.0
    %629 = vmatpush1.msra.mxu0 0.0
    %630 = vmatprep.subr.mxu0 0.0
    %631 = vmatpush1.msra.mxu0 0.0
    %632 = vmatprep.subr.mxu0 0.0
    %633 = vmatpush1.msra.mxu0 0.0
    %634 = vmatprep.subr.mxu0 0.0
    %635 = vmatpush1.msra.mxu0 0.0
    %636 = vmatprep.subr.mxu0 0.0
    %637 = vmatpush1.msra.mxu0 0.0
    %638 = vmatprep.subr.mxu0 0.0
    %639 = vmatpush1.msra.mxu0 0.0
    %640 = vmatprep.subr.mxu0 0.0
    %641 = vmatpush1.msra.mxu0 0.0
    %642 = vmatprep.subr.mxu0 0.0
    %643 = vmatpush1.msra.mxu0 0.0
    %644 = vmatprep.subr.mxu0 0.0
    %645 = vmatpush1.msra.mxu0 0.0
    %646 = vmatprep.subr.mxu0 0.0
    %647 = vmatpush1.msra.mxu0 0.0
    %648 = vmatprep.subr.mxu0 0.0
    %649 = vmatpush1.msra.mxu0 0.0
    %650 = vmatprep.subr.mxu0 0.0
    %651 = vmatpush1.msra.mxu0 0.0
    %652 = vmatprep.subr.mxu0 0.0
    %653 = vmatpush1.msra.mxu0 0.0
    %654 = vmatprep.subr.mxu0 0.0
    %655 = vmatpush1.msra.mxu0 0.0
    %656 = vmatprep.subr.mxu0 0.0
    %657 = vmatpush1.msra.mxu0 0.0
    %658 = vmatprep.subr.mxu0 0.0
    %659 = vmatpush1.msra.mxu0 0.0
    %660 = vmatprep.subr.mxu0 0.0
    %661 = vmatpush1.msra.mxu0 0.0
    %662 = vmatprep.subr.mxu0 0.0
    %663 = vmatpush1.msra.mxu0 0.0
    %664 = vmatprep.subr.mxu0 0.0
    %665 = vmatpush1.msra.mxu0 0.0
    %666 = vmatprep.subr.mxu0 0.0
    %667 = vmatpush1.msra.mxu0 0.0
    %668 = vmatprep.subr.mxu0 0.0
    %669 = vmatpush1.msra.mxu0 0.0
    %670 = vmatprep.subr.mxu0 0.0
    %671 = vmatpush1.msra.mxu0 0.0
    %672 = vmatprep.subr.mxu0 0.0
    %673 = vmatpush1.msra.mxu0 0.0
    %674 = vmatprep.subr.mxu0 0.0
    %675 = vmatpush1.msra.mxu0 0.0
    %676 = vmatprep.mubr.f32.mxu0 0.0
    %677 = vmatmul.mubr.f32.gmra.mrb[0].mxu0 %v610
    %v678 = vpop.f32.mrb[0].mxu0
    %v679 = vadd.f32 0.0, %v678
    %v680 = vpop.f32.mrb[0].mxu0
    %v681 = vadd.f32 0.0, %v680
    %682 = vdwg.mxu0
    %v683 = vadd.f32 %v681, %v570
    %v684 = vadd.f32 %v683, %v260
    %v685 = vxor.u32 %v684, 2147483648
    %v686 = vmul.f32 %v685, 1.442695
    %v687 = vpow.pop %v686
    %v688 = vadd.f32 %v687, 1.0
    %v689 = vrcp.pop %v688
    %v690 = vmul.f32 1.0, %v689
    %v691 = vtanh.pop %v684
    %v692 = vmul.f32 %v690, %v491
    %694 = vrot.lane.b32.xlu0 %v691, 32
    %v695 = vpop.permute.xlu0 %694
    %v697 = vmul.f32 %v690, %v695
    %699 = vrot.lane.b32.xlu0 %v697, 32
    %v700 = vpop.permute.xlu0 %699
    %v702 = vadd.f32 %v692, %v700
    %v703 = vtanh.pop %v702
    %705 = vrot.lane.b32.xlu0 %v703, 32
    %v706 = vpop.permute.xlu0 %705
    %v708 = vmul.f32 %v690, %v706
    %710 = vrot.lane.b32.xlu0 %v708, 64
    %v711 = vpop.permute.xlu0 %710
    %v712 = vsel %vm60, %v711, 0
    %714 = vmatprep.subr.mxu0 0.0
    %715 = vmatpush1.msra.mxu0 %v55
    %716 = vmatprep.subr.mxu0 0.0
    %717 = vmatpush1.msra.mxu0 %v56
    %718 = vmatprep.subr.mxu0 0.0
    %719 = vmatpush1.msra.mxu0 %v57
    %720 = vmatprep.subr.mxu0 0.0
    %721 = vmatpush1.msra.mxu0 %v58
    %722 = vmatprep.subr.mxu0 0.0
    %723 = vmatpush1.msra.mxu0 0.0
    %724 = vmatprep.subr.mxu0 0.0
    %725 = vmatpush1.msra.mxu0 0.0
    %726 = vmatprep.subr.mxu0 0.0
    %727 = vmatpush1.msra.mxu0 0.0
    %728 = vmatprep.subr.mxu0 0.0
    %729 = vmatpush1.msra.mxu0 0.0
    %730 = vmatprep.subr.mxu0 0.0
    %731 = vmatpush1.msra.mxu0 0.0
    %732 = vmatprep.subr.mxu0 0.0
    %733 = vmatpush1.msra.mxu0 0.0
    %734 = vmatprep.subr.mxu0 0.0
    %735 = vmatpush1.msra.mxu0 0.0
    %736 = vmatprep.subr.mxu0 0.0
    %737 = vmatpush1.msra.mxu0 0.0
    %738 = vmatprep.subr.mxu0 0.0
    %739 = vmatpush1.msra.mxu0 0.0
    %740 = vmatprep.subr.mxu0 0.0
    %741 = vmatpush1.msra.mxu0 0.0
    %742 = vmatprep.subr.mxu0 0.0
    %743 = vmatpush1.msra.mxu0 0.0
    %744 = vmatprep.subr.mxu0 0.0
    %745 = vmatpush1.msra.mxu0 0.0
    %746 = vmatprep.subr.mxu0 0.0
    %747 = vmatpush1.msra.mxu0 0.0
    %748 = vmatprep.subr.mxu0 0.0
    %749 = vmatpush1.msra.mxu0 0.0
    %750 = vmatprep.subr.mxu0 0.0
    %751 = vmatpush1.msra.mxu0 0.0
    %752 = vmatprep.subr.mxu0 0.0
    %753 = vmatpush1.msra.mxu0 0.0
    %754 = vmatprep.subr.mxu0 0.0
    %755 = vmatpush1.msra.mxu0 0.0
    %756 = vmatprep.subr.mxu0 0.0
    %757 = vmatpush1.msra.mxu0 0.0
    %758 = vmatprep.subr.mxu0 0.0
    %759 = vmatpush1.msra.mxu0 0.0
    %760 = vmatprep.subr.mxu0 0.0
    %761 = vmatpush1.msra.mxu0 0.0
    %762 = vmatprep.subr.mxu0 0.0
    %763 = vmatpush1.msra.mxu0 0.0
    %764 = vmatprep.subr.mxu0 0.0
    %765 = vmatpush1.msra.mxu0 0.0
    %766 = vmatprep.subr.mxu0 0.0
    %767 = vmatpush1.msra.mxu0 0.0
    %768 = vmatprep.subr.mxu0 0.0
    %769 = vmatpush1.msra.mxu0 0.0
    %770 = vmatprep.subr.mxu0 0.0
    %771 = vmatpush1.msra.mxu0 0.0
    %772 = vmatprep.subr.mxu0 0.0
    %773 = vmatpush1.msra.mxu0 0.0
    %774 = vmatprep.subr.mxu0 0.0
    %775 = vmatpush1.msra.mxu0 0.0
    %776 = vmatprep.subr.mxu0 0.0
    %777 = vmatpush1.msra.mxu0 0.0
    %778 = vmatprep.mubr.f32.mxu0 0.0
    %779 = vmatmul.mubr.f32.gmra.mrb[0].mxu0 %v712
    %v780 = vpop.f32.mrb[0].mxu0
    %v781 = vadd.f32 0.0, %v780
    %v782 = vpop.f32.mrb[0].mxu0
    %783 = vdwg.mxu0
    %s784 = scalar_lea.vmem %s0, 24
    %v785 = vld [vmem:[%s784] sm:$0xff]
    %787 = vset.pattern.permute.xlu0 0
    %788 = vperm.xlu0 %787, %v785
    %v789 = vpop.permute.xlu0 %788
    %v791 = vmul.f32 %v789, %v144
    %v792 = vadd.f32 %v791, %v151
    %v793 = vadd.f32 %v792, %v679
    %v794 = vxor.u32 %v793, 2147483648
    %v795 = vmul.f32 %v794, 1.442695
    %v796 = vpow.pop %v795
    %v797 = vadd.f32 %v796, 1.0
    %v798 = vrcp.pop %v797
    %v799 = vmul.f32 1.0, %v798
    %v800 = vtanh.pop %v793
    %v801 = vmul.f32 %v799, %v600
    %803 = vrot.lane.b32.xlu0 %v800, 32
    %v804 = vpop.permute.xlu0 %803
    %v806 = vmul.f32 %v799, %v804
    %808 = vrot.lane.b32.xlu0 %v806, 32
    %v809 = vpop.permute.xlu0 %808
    %v811 = vadd.f32 %v801, %v809
    %v812 = vtanh.pop %v811
    %814 = vrot.lane.b32.xlu0 %v812, 32
    %v815 = vpop.permute.xlu0 %814
    %v817 = vmul.f32 %v799, %v815
    %819 = vrot.lane.b32.xlu0 %v817, 64
    %v820 = vpop.permute.xlu0 %819
    %v821 = vsel %vm60, %v820, 0
    %823 = vmatprep.subr.mxu0 %v48
    %824 = vmatpush1.msra.mxu0 %v47
    %825 = vmatprep.subr.mxu0 %v50
    %826 = vmatpush1.msra.mxu0 %v49
    %827 = vmatprep.subr.mxu0 %v52
    %828 = vmatpush1.msra.mxu0 %v51
    %829 = vmatprep.subr.mxu0 %v54
    %830 = vmatpush1.msra.mxu0 %v53
    %831 = vmatprep.subr.mxu0 0.0
    %832 = vmatpush1.msra.mxu0 0.0
    %833 = vmatprep.subr.mxu0 0.0
    %834 = vmatpush1.msra.mxu0 0.0
    %835 = vmatprep.subr.mxu0 0.0
    %836 = vmatpush1.msra.mxu0 0.0
    %837 = vmatprep.subr.mxu0 0.0
    %838 = vmatpush1.msra.mxu0 0.0
    %839 = vmatprep.subr.mxu0 0.0
    %840 = vmatpush1.msra.mxu0 0.0
    %841 = vmatprep.subr.mxu0 0.0
    %842 = vmatpush1.msra.mxu0 0.0
    %843 = vmatprep.subr.mxu0 0.0
    %844 = vmatpush1.msra.mxu0 0.0
    %845 = vmatprep.subr.mxu0 0.0
    %846 = vmatpush1.msra.mxu0 0.0
    %847 = vmatprep.subr.mxu0 0.0
    %848 = vmatpush1.msra.mxu0 0.0
    %849 = vmatprep.subr.mxu0 0.0
    %850 = vmatpush1.msra.mxu0 0.0
    %851 = vmatprep.subr.mxu0 0.0
    %852 = vmatpush1.msra.mxu0 0.0
    %853 = vmatprep.subr.mxu0 0.0
    %854 = vmatpush1.msra.mxu0 0.0
    %855 = vmatprep.subr.mxu0 0.0
    %856 = vmatpush1.msra.mxu0 0.0
    %857 = vmatprep.subr.mxu0 0.0
    %858 = vmatpush1.msra.mxu0 0.0
    %859 = vmatprep.subr.mxu0 0.0
    %860 = vmatpush1.msra.mxu0 0.0
    %861 = vmatprep.subr.mxu0 0.0
    %862 = vmatpush1.msra.mxu0 0.0
    %863 = vmatprep.subr.mxu0 0.0
    %864 = vmatpush1.msra.mxu0 0.0
    %865 = vmatprep.subr.mxu0 0.0
    %866 = vmatpush1.msra.mxu0 0.0
    %867 = vmatprep.subr.mxu0 0.0
    %868 = vmatpush1.msra.mxu0 0.0
    %869 = vmatprep.subr.mxu0 0.0
    %870 = vmatpush1.msra.mxu0 0.0
    %871 = vmatprep.subr.mxu0 0.0
    %872 = vmatpush1.msra.mxu0 0.0
    %873 = vmatprep.subr.mxu0 0.0
    %874 = vmatpush1.msra.mxu0 0.0
    %875 = vmatprep.subr.mxu0 0.0
    %876 = vmatpush1.msra.mxu0 0.0
    %877 = vmatprep.subr.mxu0 0.0
    %878 = vmatpush1.msra.mxu0 0.0
    %879 = vmatprep.subr.mxu0 0.0
    %880 = vmatpush1.msra.mxu0 0.0
    %881 = vmatprep.subr.mxu0 0.0
    %882 = vmatpush1.msra.mxu0 0.0
    %883 = vmatprep.subr.mxu0 0.0
    %884 = vmatpush1.msra.mxu0 0.0
    %885 = vmatprep.subr.mxu0 0.0
    %886 = vmatpush1.msra.mxu0 0.0
    %887 = vmatprep.mubr.f32.mxu0 0.0
    %888 = vmatmul.mubr.f32.gmra.mrb[0].mxu0 %v821
    %v889 = vpop.f32.mrb[0].mxu0
    %v890 = vadd.f32 0.0, %v889
    %v891 = vpop.f32.mrb[0].mxu0
    %v892 = vadd.f32 0.0, %v891
    %893 = vdwg.mxu0
    %v894 = vadd.f32 %v892, %v781
    %v895 = vadd.f32 %v894, %v260
    %v896 = vxor.u32 %v895, 2147483648
    %v897 = vmul.f32 %v896, 1.442695
    %v898 = vpow.pop %v897
    %v899 = vadd.f32 %v898, 1.0
    %v900 = vrcp.pop %v899
    %v901 = vmul.f32 1.0, %v900
    %v902 = vtanh.pop %v895
    %v903 = vmul.f32 %v901, %v702
    %905 = vrot.lane.b32.xlu0 %v902, 32
    %v906 = vpop.permute.xlu0 %905
    %v908 = vmul.f32 %v901, %v906
    %910 = vrot.lane.b32.xlu0 %v908, 32
    %v911 = vpop.permute.xlu0 %910
    %v913 = vadd.f32 %v903, %v911
    %v914 = vtanh.pop %v913
    %916 = vrot.lane.b32.xlu0 %v914, 32
    %v917 = vpop.permute.xlu0 %916
    %v919 = vmul.f32 %v901, %v917
    %921 = vrot.lane.b32.xlu0 %v919, 64
    %v922 = vpop.permute.xlu0 %921
    %v923 = vsel %vm60, %v922, 0
    %925 = vmatprep.subr.mxu0 0.0
    %926 = vmatpush1.msra.mxu0 %v55
    %927 = vmatprep.subr.mxu0 0.0
    %928 = vmatpush1.msra.mxu0 %v56
    %929 = vmatprep.subr.mxu0 0.0
    %930 = vmatpush1.msra.mxu0 %v57
    %931 = vmatprep.subr.mxu0 0.0
    %932 = vmatpush1.msra.mxu0 %v58
    %933 = vmatprep.subr.mxu0 0.0
    %934 = vmatpush1.msra.mxu0 0.0
    %935 = vmatprep.subr.mxu0 0.0
    %936 = vmatpush1.msra.mxu0 0.0
    %937 = vmatprep.subr.mxu0 0.0
    %938 = vmatpush1.msra.mxu0 0.0
    %939 = vmatprep.subr.mxu0 0.0
    %940 = vmatpush1.msra.mxu0 0.0
    %941 = vmatprep.subr.mxu0 0.0
    %942 = vmatpush1.msra.mxu0 0.0
    %943 = vmatprep.subr.mxu0 0.0
    %944 = vmatpush1.msra.mxu0 0.0
    %945 = vmatprep.subr.mxu0 0.0
    %946 = vmatpush1.msra.mxu0 0.0
    %947 = vmatprep.subr.mxu0 0.0
    %948 = vmatpush1.msra.mxu0 0.0
    %949 = vmatprep.subr.mxu0 0.0
    %950 = vmatpush1.msra.mxu0 0.0
    %951 = vmatprep.subr.mxu0 0.0
    %952 = vmatpush1.msra.mxu0 0.0
    %953 = vmatprep.subr.mxu0 0.0
    %954 = vmatpush1.msra.mxu0 0.0
    %955 = vmatprep.subr.mxu0 0.0
    %956 = vmatpush1.msra.mxu0 0.0
    %957 = vmatprep.subr.mxu0 0.0
    %958 = vmatpush1.msra.mxu0 0.0
    %959 = vmatprep.subr.mxu0 0.0
    %960 = vmatpush1.msra.mxu0 0.0
    %961 = vmatprep.subr.mxu0 0.0
    %962 = vmatpush1.msra.mxu0 0.0
    %963 = vmatprep.subr.mxu0 0.0
    %964 = vmatpush1.msra.mxu0 0.0
    %965 = vmatprep.subr.mxu0 0.0
    %966 = vmatpush1.msra.mxu0 0.0
    %967 = vmatprep.subr.mxu0 0.0
    %968 = vmatpush1.msra.mxu0 0.0
    %969 = vmatprep.subr.mxu0 0.0
    %970 = vmatpush1.msra.mxu0 0.0
    %971 = vmatprep.subr.mxu0 0.0
    %972 = vmatpush1.msra.mxu0 0.0
    %973 = vmatprep.subr.mxu0 0.0
    %974 = vmatpush1.msra.mxu0 0.0
    %975 = vmatprep.subr.mxu0 0.0
    %976 = vmatpush1.msra.mxu0 0.0
    %977 = vmatprep.subr.mxu0 0.0
    %978 = vmatpush1.msra.mxu0 0.0
    %979 = vmatprep.subr.mxu0 0.0
    %980 = vmatpush1.msra.mxu0 0.0
    %981 = vmatprep.subr.mxu0 0.0
    %982 = vmatpush1.msra.mxu0 0.0
    %983 = vmatprep.subr.mxu0 0.0
    %984 = vmatpush1.msra.mxu0 0.0
    %985 = vmatprep.subr.mxu0 0.0
    %986 = vmatpush1.msra.mxu0 0.0
    %987 = vmatprep.subr.mxu0 0.0
    %988 = vmatpush1.msra.mxu0 0.0
    %989 = vmatprep.mubr.f32.mxu0 0.0
    %990 = vmatmul.mubr.f32.gmra.mrb[0].mxu0 %v923
    %v991 = vpop.f32.mrb[0].mxu0
    %v992 = vadd.f32 0.0, %v991
    %v993 = vpop.f32.mrb[0].mxu0
    %994 = vdwg.mxu0
    %s995 = scalar_lea.vmem %s0, 32
    %v996 = vld [vmem:[%s995] sm:$0xff]
    %998 = vset.pattern.permute.xlu0 0
    %999 = vperm.xlu0 %998, %v996
    %v1000 = vpop.permute.xlu0 %999
    %v1002 = vmul.f32 %v1000, %v144
    %v1003 = vadd.f32 %v1002, %v151
    %v1004 = vadd.f32 %v1003, %v890
    %v1005 = vxor.u32 %v1004, 2147483648
    %v1006 = vmul.f32 %v1005, 1.442695
    %v1007 = vpow.pop %v1006
    %v1008 = vadd.f32 %v1007, 1.0
    %v1009 = vrcp.pop %v1008
    %v1010 = vmul.f32 1.0, %v1009
    %v1011 = vtanh.pop %v1004
    %v1012 = vmul.f32 %v1010, %v811
    %1014 = vrot.lane.b32.xlu0 %v1011, 32
    %v1015 = vpop.permute.xlu0 %1014
    %v1017 = vmul.f32 %v1010, %v1015
    %1019 = vrot.lane.b32.xlu0 %v1017, 32
    %v1020 = vpop.permute.xlu0 %1019
    %v1022 = vadd.f32 %v1012, %v1020
    %v1023 = vtanh.pop %v1022
    %1025 = vrot.lane.b32.xlu0 %v1023, 32
    %v1026 = vpop.permute.xlu0 %1025
    %v1028 = vmul.f32 %v1010, %v1026
    %1030 = vrot.lane.b32.xlu0 %v1028, 64
    %v1031 = vpop.permute.xlu0 %1030
    %v1032 = vsel %vm60, %v1031, 0
    %1034 = vmatprep.subr.mxu0 %v48
    %1035 = vmatpush1.msra.mxu0 %v47
    %1036 = vmatprep.subr.mxu0 %v50
    %1037 = vmatpush1.msra.mxu0 %v49
    %1038 = vmatprep.subr.mxu0 %v52
    %1039 = vmatpush1.msra.mxu0 %v51
    %1040 = vmatprep.subr.mxu0 %v54
    %1041 = vmatpush1.msra.mxu0 %v53
    %1042 = vmatprep.subr.mxu0 0.0
    %1043 = vmatpush1.msra.mxu0 0.0
    %1044 = vmatprep.subr.mxu0 0.0
    %1045 = vmatpush1.msra.mxu0 0.0
    %1046 = vmatprep.subr.mxu0 0.0
    %1047 = vmatpush1.msra.mxu0 0.0
    %1048 = vmatprep.subr.mxu0 0.0
    %1049 = vmatpush1.msra.mxu0 0.0
    %1050 = vmatprep.subr.mxu0 0.0
    %1051 = vmatpush1.msra.mxu0 0.0
    %1052 = vmatprep.subr.mxu0 0.0
    %1053 = vmatpush1.msra.mxu0 0.0
    %1054 = vmatprep.subr.mxu0 0.0
    %1055 = vmatpush1.msra.mxu0 0.0
    %1056 = vmatprep.subr.mxu0 0.0
    %1057 = vmatpush1.msra.mxu0 0.0
    %1058 = vmatprep.subr.mxu0 0.0
    %1059 = vmatpush1.msra.mxu0 0.0
    %1060 = vmatprep.subr.mxu0 0.0
    %1061 = vmatpush1.msra.mxu0 0.0
    %1062 = vmatprep.subr.mxu0 0.0
    %1063 = vmatpush1.msra.mxu0 0.0
    %1064 = vmatprep.subr.mxu0 0.0
    %1065 = vmatpush1.msra.mxu0 0.0
    %1066 = vmatprep.subr.mxu0 0.0
    %1067 = vmatpush1.msra.mxu0 0.0
    %1068 = vmatprep.subr.mxu0 0.0
    %1069 = vmatpush1.msra.mxu0 0.0
    %1070 = vmatprep.subr.mxu0 0.0
    %1071 = vmatpush1.msra.mxu0 0.0
    %1072 = vmatprep.subr.mxu0 0.0
    %1073 = vmatpush1.msra.mxu0 0.0
    %1074 = vmatprep.subr.mxu0 0.0
    %1075 = vmatpush1.msra.mxu0 0.0
    %1076 = vmatprep.subr.mxu0 0.0
    %1077 = vmatpush1.msra.mxu0 0.0
    %1078 = vmatprep.subr.mxu0 0.0
    %1079 = vmatpush1.msra.mxu0 0.0
    %1080 = vmatprep.subr.mxu0 0.0
    %1081 = vmatpush1.msra.mxu0 0.0
    %1082 = vmatprep.subr.mxu0 0.0
    %1083 = vmatpush1.msra.mxu0 0.0
    %1084 = vmatprep.subr.mxu0 0.0
    %1085 = vmatpush1.msra.mxu0 0.0
    %1086 = vmatprep.subr.mxu0 0.0
    %1087 = vmatpush1.msra.mxu0 0.0
    %1088 = vmatprep.subr.mxu0 0.0
    %1089 = vmatpush1.msra.mxu0 0.0
    %1090 = vmatprep.subr.mxu0 0.0
    %1091 = vmatpush1.msra.mxu0 0.0
    %1092 = vmatprep.subr.mxu0 0.0
    %1093 = vmatpush1.msra.mxu0 0.0
    %1094 = vmatprep.subr.mxu0 0.0
    %1095 = vmatpush1.msra.mxu0 0.0
    %1096 = vmatprep.subr.mxu0 0.0
    %1097 = vmatpush1.msra.mxu0 0.0
    %1098 = vmatprep.mubr.f32.mxu0 0.0
    %1099 = vmatmul.mubr.f32.gmra.mrb[0].mxu0 %v1032
    %v1100 = vpop.f32.mrb[0].mxu0
    %v1101 = vadd.f32 0.0, %v1100
    %v1102 = vpop.f32.mrb[0].mxu0
    %v1103 = vadd.f32 0.0, %v1102
    %1104 = vdwg.mxu0
    %v1105 = vadd.f32 %v1103, %v992
    %v1106 = vadd.f32 %v1105, %v260
    %v1107 = vxor.u32 %v1106, 2147483648
    %v1108 = vmul.f32 %v1107, 1.442695
    %v1109 = vpow.pop %v1108
    %v1110 = vadd.f32 %v1109, 1.0
    %v1111 = vrcp.pop %v1110
    %v1112 = vmul.f32 1.0, %v1111
    %v1113 = vtanh.pop %v1106
    %v1114 = vmul.f32 %v1112, %v913
    %1116 = vrot.lane.b32.xlu0 %v1113, 32
    %v1117 = vpop.permute.xlu0 %1116
    %v1119 = vmul.f32 %v1112, %v1117
    %1121 = vrot.lane.b32.xlu0 %v1119, 32
    %v1122 = vpop.permute.xlu0 %1121
    %v1124 = vadd.f32 %v1114, %v1122
    %v1125 = vtanh.pop %v1124
    %1127 = vrot.lane.b32.xlu0 %v1125, 32
    %v1128 = vpop.permute.xlu0 %1127
    %v1130 = vmul.f32 %v1112, %v1128
    %1132 = vrot.lane.b32.xlu0 %v1130, 64
    %v1133 = vpop.permute.xlu0 %1132
    %v1134 = vsel %vm60, %v1133, 0
    %1136 = vmatprep.subr.mxu0 0.0
    %1137 = vmatpush1.msra.mxu0 %v55
    %1138 = vmatprep.subr.mxu0 0.0
    %1139 = vmatpush1.msra.mxu0 %v56
    %1140 = vmatprep.subr.mxu0 0.0
    %1141 = vmatpush1.msra.mxu0 %v57
    %1142 = vmatprep.subr.mxu0 0.0
    %1143 = vmatpush1.msra.mxu0 %v58
    %1144 = vmatprep.subr.mxu0 0.0
    %1145 = vmatpush1.msra.mxu0 0.0
    %1146 = vmatprep.subr.mxu0 0.0
    %1147 = vmatpush1.msra.mxu0 0.0
    %1148 = vmatprep.subr.mxu0 0.0
    %1149 = vmatpush1.msra.mxu0 0.0
    %1150 = vmatprep.subr.mxu0 0.0
    %1151 = vmatpush1.msra.mxu0 0.0
    %1152 = vmatprep.subr.mxu0 0.0
    %1153 = vmatpush1.msra.mxu0 0.0
    %1154 = vmatprep.subr.mxu0 0.0
    %1155 = vmatpush1.msra.mxu0 0.0
    %1156 = vmatprep.subr.mxu0 0.0
    %1157 = vmatpush1.msra.mxu0 0.0
    %1158 = vmatprep.subr.mxu0 0.0
    %1159 = vmatpush1.msra.mxu0 0.0
    %1160 = vmatprep.subr.mxu0 0.0
    %1161 = vmatpush1.msra.mxu0 0.0
    %1162 = vmatprep.subr.mxu0 0.0
    %1163 = vmatpush1.msra.mxu0 0.0
    %1164 = vmatprep.subr.mxu0 0.0
    %1165 = vmatpush1.msra.mxu0 0.0
    %1166 = vmatprep.subr.mxu0 0.0
    %1167 = vmatpush1.msra.mxu0 0.0
    %1168 = vmatprep.subr.mxu0 0.0
    %1169 = vmatpush1.msra.mxu0 0.0
    %1170 = vmatprep.subr.mxu0 0.0
    %1171 = vmatpush1.msra.mxu0 0.0
    %1172 = vmatprep.subr.mxu0 0.0
    %1173 = vmatpush1.msra.mxu0 0.0
    %1174 = vmatprep.subr.mxu0 0.0
    %1175 = vmatpush1.msra.mxu0 0.0
    %1176 = vmatprep.subr.mxu0 0.0
    %1177 = vmatpush1.msra.mxu0 0.0
    %1178 = vmatprep.subr.mxu0 0.0
    %1179 = vmatpush1.msra.mxu0 0.0
    %1180 = vmatprep.subr.mxu0 0.0
    %1181 = vmatpush1.msra.mxu0 0.0
    %1182 = vmatprep.subr.mxu0 0.0
    %1183 = vmatpush1.msra.mxu0 0.0
    %1184 = vmatprep.subr.mxu0 0.0
    %1185 = vmatpush1.msra.mxu0 0.0
    %1186 = vmatprep.subr.mxu0 0.0
    %1187 = vmatpush1.msra.mxu0 0.0
    %1188 = vmatprep.subr.mxu0 0.0
    %1189 = vmatpush1.msra.mxu0 0.0
    %1190 = vmatprep.subr.mxu0 0.0
    %1191 = vmatpush1.msra.mxu0 0.0
    %1192 = vmatprep.subr.mxu0 0.0
    %1193 = vmatpush1.msra.mxu0 0.0
    %1194 = vmatprep.subr.mxu0 0.0
    %1195 = vmatpush1.msra.mxu0 0.0
    %1196 = vmatprep.subr.mxu0 0.0
    %1197 = vmatpush1.msra.mxu0 0.0
    %1198 = vmatprep.subr.mxu0 0.0
    %1199 = vmatpush1.msra.mxu0 0.0
    %1200 = vmatprep.mubr.f32.mxu0 0.0
    %1201 = vmatmul.mubr.f32.gmra.mrb[0].mxu0 %v1134
    %v1202 = vpop.f32.mrb[0].mxu0
    %v1203 = vadd.f32 0.0, %v1202
    %v1204 = vpop.f32.mrb[0].mxu0
    %1205 = vdwg.mxu0
    %s1206 = scalar_lea.vmem %s0, 40
    %v1207 = vld [vmem:[%s1206] sm:$0xff]
    %1209 = vset.pattern.permute.xlu0 0
    %1210 = vperm.xlu0 %1209, %v1207
    %v1211 = vpop.permute.xlu0 %1210
    %v1213 = vmul.f32 %v1211, %v144
    %v1214 = vadd.f32 %v1213, %v151
    %v1215 = vadd.f32 %v1214, %v1101
    %v1216 = vxor.u32 %v1215, 2147483648
    %v1217 = vmul.f32 %v1216, 1.442695
    %v1218 = vpow.pop %v1217
    %v1219 = vadd.f32 %v1218, 1.0
    %v1220 = vrcp.pop %v1219
    %v1221 = vmul.f32 1.0, %v1220
    %v1222 = vtanh.pop %v1215
    %v1223 = vmul.f32 %v1221, %v1022
    %1225 = vrot.lane.b32.xlu0 %v1222, 32
    %v1226 = vpop.permute.xlu0 %1225
    %v1228 = vmul.f32 %v1221, %v1226
    %1230 = vrot.lane.b32.xlu0 %v1228, 32
    %v1231 = vpop.permute.xlu0 %1230
    %v1233 = vadd.f32 %v1223, %v1231
    %v1234 = vtanh.pop %v1233
    %1236 = vrot.lane.b32.xlu0 %v1234, 32
    %v1237 = vpop.permute.xlu0 %1236
    %v1239 = vmul.f32 %v1221, %v1237
    %1241 = vrot.lane.b32.xlu0 %v1239, 64
    %v1242 = vpop.permute.xlu0 %1241
    %v1243 = vsel %vm60, %v1242, 0
    %1245 = vmatprep.subr.mxu0 %v48
    %1246 = vmatpush1.msra.mxu0 %v47
    %1247 = vmatprep.subr.mxu0 %v50
    %1248 = vmatpush1.msra.mxu0 %v49
    %1249 = vmatprep.subr.mxu0 %v52
    %1250 = vmatpush1.msra.mxu0 %v51
    %1251 = vmatprep.subr.mxu0 %v54
    %1252 = vmatpush1.msra.mxu0 %v53
    %1253 = vmatprep.subr.mxu0 0.0
    %1254 = vmatpush1.msra.mxu0 0.0
    %1255 = vmatprep.subr.mxu0 0.0
    %1256 = vmatpush1.msra.mxu0 0.0
    %1257 = vmatprep.subr.mxu0 0.0
    %1258 = vmatpush1.msra.mxu0 0.0
    %1259 = vmatprep.subr.mxu0 0.0
    %1260 = vmatpush1.msra.mxu0 0.0
    %1261 = vmatprep.subr.mxu0 0.0
    %1262 = vmatpush1.msra.mxu0 0.0
    %1263 = vmatprep.subr.mxu0 0.0
    %1264 = vmatpush1.msra.mxu0 0.0
    %1265 = vmatprep.subr.mxu0 0.0
    %1266 = vmatpush1.msra.mxu0 0.0
    %1267 = vmatprep.subr.mxu0 0.0
    %1268 = vmatpush1.msra.mxu0 0.0
    %1269 = vmatprep.subr.mxu0 0.0
    %1270 = vmatpush1.msra.mxu0 0.0
    %1271 = vmatprep.subr.mxu0 0.0
    %1272 = vmatpush1.msra.mxu0 0.0
    %1273 = vmatprep.subr.mxu0 0.0
    %1274 = vmatpush1.msra.mxu0 0.0
    %1275 = vmatprep.subr.mxu0 0.0
    %1276 = vmatpush1.msra.mxu0 0.0
    %1277 = vmatprep.subr.mxu0 0.0
    %1278 = vmatpush1.msra.mxu0 0.0
    %1279 = vmatprep.subr.mxu0 0.0
    %1280 = vmatpush1.msra.mxu0 0.0
    %1281 = vmatprep.subr.mxu0 0.0
    %1282 = vmatpush1.msra.mxu0 0.0
    %1283 = vmatprep.subr.mxu0 0.0
    %1284 = vmatpush1.msra.mxu0 0.0
    %1285 = vmatprep.subr.mxu0 0.0
    %1286 = vmatpush1.msra.mxu0 0.0
    %1287 = vmatprep.subr.mxu0 0.0
    %1288 = vmatpush1.msra.mxu0 0.0
    %1289 = vmatprep.subr.mxu0 0.0
    %1290 = vmatpush1.msra.mxu0 0.0
    %1291 = vmatprep.subr.mxu0 0.0
    %1292 = vmatpush1.msra.mxu0 0.0
    %1293 = vmatprep.subr.mxu0 0.0
    %1294 = vmatpush1.msra.mxu0 0.0
    %1295 = vmatprep.subr.mxu0 0.0
    %1296 = vmatpush1.msra.mxu0 0.0
    %1297 = vmatprep.subr.mxu0 0.0
    %1298 = vmatpush1.msra.mxu0 0.0
    %1299 = vmatprep.subr.mxu0 0.0
    %1300 = vmatpush1.msra.mxu0 0.0
    %1301 = vmatprep.subr.mxu0 0.0
    %1302 = vmatpush1.msra.mxu0 0.0
    %1303 = vmatprep.subr.mxu0 0.0
    %1304 = vmatpush1.msra.mxu0 0.0
    %1305 = vmatprep.subr.mxu0 0.0
    %1306 = vmatpush1.msra.mxu0 0.0
    %1307 = vmatprep.subr.mxu0 0.0
    %1308 = vmatpush1.msra.mxu0 0.0
    %1309 = vmatprep.mubr.f32.mxu0 0.0
    %1310 = vmatmul.mubr.f32.gmra.mrb[0].mxu0 %v1243
    %v1311 = vpop.f32.mrb[0].mxu0
    %v1312 = vadd.f32 0.0, %v1311
    %v1313 = vpop.f32.mrb[0].mxu0
    %v1314 = vadd.f32 0.0, %v1313
    %1315 = vdwg.mxu0
    %v1316 = vadd.f32 %v1314, %v1203
    %v1317 = vadd.f32 %v1316, %v260
    %v1318 = vxor.u32 %v1317, 2147483648
    %v1319 = vmul.f32 %v1318, 1.442695
    %v1320 = vpow.pop %v1319
    %v1321 = vadd.f32 %v1320, 1.0
    %v1322 = vrcp.pop %v1321
    %v1323 = vmul.f32 1.0, %v1322
    %v1324 = vtanh.pop %v1317
    %v1325 = vmul.f32 %v1323, %v1124
    %1327 = vrot.lane.b32.xlu0 %v1324, 32
    %v1328 = vpop.permute.xlu0 %1327
    %v1330 = vmul.f32 %v1323, %v1328
    %1332 = vrot.lane.b32.xlu0 %v1330, 32
    %v1333 = vpop.permute.xlu0 %1332
    %v1335 = vadd.f32 %v1325, %v1333
    %v1336 = vtanh.pop %v1335
    %1338 = vrot.lane.b32.xlu0 %v1336, 32
    %v1339 = vpop.permute.xlu0 %1338
    %v1341 = vmul.f32 %v1323, %v1339
    %1343 = vrot.lane.b32.xlu0 %v1341, 64
    %v1344 = vpop.permute.xlu0 %1343
    %v1345 = vsel %vm60, %v1344, 0
    %1347 = vmatprep.subr.mxu0 0.0
    %1348 = vmatpush1.msra.mxu0 %v55
    %1349 = vmatprep.subr.mxu0 0.0
    %1350 = vmatpush1.msra.mxu0 %v56
    %1351 = vmatprep.subr.mxu0 0.0
    %1352 = vmatpush1.msra.mxu0 %v57
    %1353 = vmatprep.subr.mxu0 0.0
    %1354 = vmatpush1.msra.mxu0 %v58
    %1355 = vmatprep.subr.mxu0 0.0
    %1356 = vmatpush1.msra.mxu0 0.0
    %1357 = vmatprep.subr.mxu0 0.0
    %1358 = vmatpush1.msra.mxu0 0.0
    %1359 = vmatprep.subr.mxu0 0.0
    %1360 = vmatpush1.msra.mxu0 0.0
    %1361 = vmatprep.subr.mxu0 0.0
    %1362 = vmatpush1.msra.mxu0 0.0
    %1363 = vmatprep.subr.mxu0 0.0
    %1364 = vmatpush1.msra.mxu0 0.0
    %1365 = vmatprep.subr.mxu0 0.0
    %1366 = vmatpush1.msra.mxu0 0.0
    %1367 = vmatprep.subr.mxu0 0.0
    %1368 = vmatpush1.msra.mxu0 0.0
    %1369 = vmatprep.subr.mxu0 0.0
    %1370 = vmatpush1.msra.mxu0 0.0
    %1371 = vmatprep.subr.mxu0 0.0
    %1372 = vmatpush1.msra.mxu0 0.0
    %1373 = vmatprep.subr.mxu0 0.0
    %1374 = vmatpush1.msra.mxu0 0.0
    %1375 = vmatprep.subr.mxu0 0.0
    %1376 = vmatpush1.msra.mxu0 0.0
    %1377 = vmatprep.subr.mxu0 0.0
    %1378 = vmatpush1.msra.mxu0 0.0
    %1379 = vmatprep.subr.mxu0 0.0
    %1380 = vmatpush1.msra.mxu0 0.0
    %1381 = vmatprep.subr.mxu0 0.0
    %1382 = vmatpush1.msra.mxu0 0.0
    %1383 = vmatprep.subr.mxu0 0.0
    %1384 = vmatpush1.msra.mxu0 0.0
    %1385 = vmatprep.subr.mxu0 0.0
    %1386 = vmatpush1.msra.mxu0 0.0
    %1387 = vmatprep.subr.mxu0 0.0
    %1388 = vmatpush1.msra.mxu0 0.0
    %1389 = vmatprep.subr.mxu0 0.0
    %1390 = vmatpush1.msra.mxu0 0.0
    %1391 = vmatprep.subr.mxu0 0.0
    %1392 = vmatpush1.msra.mxu0 0.0
    %1393 = vmatprep.subr.mxu0 0.0
    %1394 = vmatpush1.msra.mxu0 0.0
    %1395 = vmatprep.subr.mxu0 0.0
    %1396 = vmatpush1.msra.mxu0 0.0
    %1397 = vmatprep.subr.mxu0 0.0
    %1398 = vmatpush1.msra.mxu0 0.0
    %1399 = vmatprep.subr.mxu0 0.0
    %1400 = vmatpush1.msra.mxu0 0.0
    %1401 = vmatprep.subr.mxu0 0.0
    %1402 = vmatpush1.msra.mxu0 0.0
    %1403 = vmatprep.subr.mxu0 0.0
    %1404 = vmatpush1.msra.mxu0 0.0
    %1405 = vmatprep.subr.mxu0 0.0
    %1406 = vmatpush1.msra.mxu0 0.0
    %1407 = vmatprep.subr.mxu0 0.0
    %1408 = vmatpush1.msra.mxu0 0.0
    %1409 = vmatprep.subr.mxu0 0.0
    %1410 = vmatpush1.msra.mxu0 0.0
    %1411 = vmatprep.mubr.f32.mxu0 0.0
    %1412 = vmatmul.mubr.f32.gmra.mrb[0].mxu0 %v1345
    %v1413 = vpop.f32.mrb[0].mxu0
    %v1414 = vadd.f32 0.0, %v1413
    %v1415 = vpop.f32.mrb[0].mxu0
    %1416 = vdwg.mxu0
    %s1417 = scalar_lea.vmem %s0, 48
    %v1418 = vld [vmem:[%s1417] sm:$0xff]
    %1420 = vset.pattern.permute.xlu0 0
    %1421 = vperm.xlu0 %1420, %v1418
    %v1422 = vpop.permute.xlu0 %1421
    %v1424 = vmul.f32 %v1422, %v144
    %v1425 = vadd.f32 %v1424, %v151
    %v1426 = vadd.f32 %v1425, %v1312
    %v1427 = vxor.u32 %v1426, 2147483648
    %v1428 = vmul.f32 %v1427, 1.442695
    %v1429 = vpow.pop %v1428
    %v1430 = vadd.f32 %v1429, 1.0
    %v1431 = vrcp.pop %v1430
    %v1432 = vmul.f32 1.0, %v1431
    %v1433 = vtanh.pop %v1426
    %v1434 = vmul.f32 %v1432, %v1233
    %1436 = vrot.lane.b32.xlu0 %v1433, 32
    %v1437 = vpop.permute.xlu0 %1436
    %v1439 = vmul.f32 %v1432, %v1437
    %1441 = vrot.lane.b32.xlu0 %v1439, 32
    %v1442 = vpop.permute.xlu0 %1441
    %v1444 = vadd.f32 %v1434, %v1442
    %v1445 = vtanh.pop %v1444
    %1447 = vrot.lane.b32.xlu0 %v1445, 32
    %v1448 = vpop.permute.xlu0 %1447
    %v1450 = vmul.f32 %v1432, %v1448
    %1452 = vrot.lane.b32.xlu0 %v1450, 64
    %v1453 = vpop.permute.xlu0 %1452
    %v1454 = vsel %vm60, %v1453, 0
    %1456 = vmatprep.subr.mxu0 %v48
    %1457 = vmatpush1.msra.mxu0 %v47
    %1458 = vmatprep.subr.mxu0 %v50
    %1459 = vmatpush1.msra.mxu0 %v49
    %1460 = vmatprep.subr.mxu0 %v52
    %1461 = vmatpush1.msra.mxu0 %v51
    %1462 = vmatprep.subr.mxu0 %v54
    %1463 = vmatpush1.msra.mxu0 %v53
    %1464 = vmatprep.subr.mxu0 0.0
    %1465 = vmatpush1.msra.mxu0 0.0
    %1466 = vmatprep.subr.mxu0 0.0
    %1467 = vmatpush1.msra.mxu0 0.0
    %1468 = vmatprep.subr.mxu0 0.0
    %1469 = vmatpush1.msra.mxu0 0.0
    %1470 = vmatprep.subr.mxu0 0.0
    %1471 = vmatpush1.msra.mxu0 0.0
    %1472 = vmatprep.subr.mxu0 0.0
    %1473 = vmatpush1.msra.mxu0 0.0
    %1474 = vmatprep.subr.mxu0 0.0
    %1475 = vmatpush1.msra.mxu0 0.0
    %1476 = vmatprep.subr.mxu0 0.0
    %1477 = vmatpush1.msra.mxu0 0.0
    %1478 = vmatprep.subr.mxu0 0.0
    %1479 = vmatpush1.msra.mxu0 0.0
    %1480 = vmatprep.subr.mxu0 0.0
    %1481 = vmatpush1.msra.mxu0 0.0
    %1482 = vmatprep.subr.mxu0 0.0
    %1483 = vmatpush1.msra.mxu0 0.0
    %1484 = vmatprep.subr.mxu0 0.0
    %1485 = vmatpush1.msra.mxu0 0.0
    %1486 = vmatprep.subr.mxu0 0.0
    %1487 = vmatpush1.msra.mxu0 0.0
    %1488 = vmatprep.subr.mxu0 0.0
    %1489 = vmatpush1.msra.mxu0 0.0
    %1490 = vmatprep.subr.mxu0 0.0
    %1491 = vmatpush1.msra.mxu0 0.0
    %1492 = vmatprep.subr.mxu0 0.0
    %1493 = vmatpush1.msra.mxu0 0.0
    %1494 = vmatprep.subr.mxu0 0.0
    %1495 = vmatpush1.msra.mxu0 0.0
    %1496 = vmatprep.subr.mxu0 0.0
    %1497 = vmatpush1.msra.mxu0 0.0
    %1498 = vmatprep.subr.mxu0 0.0
    %1499 = vmatpush1.msra.mxu0 0.0
    %1500 = vmatprep.subr.mxu0 0.0
    %1501 = vmatpush1.msra.mxu0 0.0
    %1502 = vmatprep.subr.mxu0 0.0
    %1503 = vmatpush1.msra.mxu0 0.0
    %1504 = vmatprep.subr.mxu0 0.0
    %1505 = vmatpush1.msra.mxu0 0.0
    %1506 = vmatprep.subr.mxu0 0.0
    %1507 = vmatpush1.msra.mxu0 0.0
    %1508 = vmatprep.subr.mxu0 0.0
    %1509 = vmatpush1.msra.mxu0 0.0
    %1510 = vmatprep.subr.mxu0 0.0
    %1511 = vmatpush1.msra.mxu0 0.0
    %1512 = vmatprep.subr.mxu0 0.0
    %1513 = vmatpush1.msra.mxu0 0.0
    %1514 = vmatprep.subr.mxu0 0.0
    %1515 = vmatpush1.msra.mxu0 0.0
    %1516 = vmatprep.subr.mxu0 0.0
    %1517 = vmatpush1.msra.mxu0 0.0
    %1518 = vmatprep.subr.mxu0 0.0
    %1519 = vmatpush1.msra.mxu0 0.0
    %1520 = vmatprep.mubr.f32.mxu0 0.0
    %1521 = vmatmul.mubr.f32.gmra.mrb[0].mxu0 %v1454
    %v1522 = vpop.f32.mrb[0].mxu0
    %v1523 = vadd.f32 0.0, %v1522
    %v1524 = vpop.f32.mrb[0].mxu0
    %v1525 = vadd.f32 0.0, %v1524
    %1526 = vdwg.mxu0
    %v1527 = vadd.f32 %v1525, %v1414
    %v1528 = vadd.f32 %v1527, %v260
    %v1529 = vxor.u32 %v1528, 2147483648
    %v1530 = vmul.f32 %v1529, 1.442695
    %v1531 = vpow.pop %v1530
    %v1532 = vadd.f32 %v1531, 1.0
    %v1533 = vrcp.pop %v1532
    %v1534 = vmul.f32 1.0, %v1533
    %v1535 = vtanh.pop %v1528
    %v1536 = vmul.f32 %v1534, %v1335
    %1538 = vrot.lane.b32.xlu0 %v1535, 32
    %v1539 = vpop.permute.xlu0 %1538
    %v1541 = vmul.f32 %v1534, %v1539
    %1543 = vrot.lane.b32.xlu0 %v1541, 32
    %v1544 = vpop.permute.xlu0 %1543
    %v1546 = vadd.f32 %v1536, %v1544
    %v1547 = vtanh.pop %v1546
    %1549 = vrot.lane.b32.xlu0 %v1547, 32
    %v1550 = vpop.permute.xlu0 %1549
    %v1552 = vmul.f32 %v1534, %v1550
    %1554 = vrot.lane.b32.xlu0 %v1552, 64
    %v1555 = vpop.permute.xlu0 %1554
    %v1556 = vsel %vm60, %v1555, 0
    %1558 = vmatprep.subr.mxu0 0.0
    %1559 = vmatpush1.msra.mxu0 %v55
    %1560 = vmatprep.subr.mxu0 0.0
    %1561 = vmatpush1.msra.mxu0 %v56
    %1562 = vmatprep.subr.mxu0 0.0
    %1563 = vmatpush1.msra.mxu0 %v57
    %1564 = vmatprep.subr.mxu0 0.0
    %1565 = vmatpush1.msra.mxu0 %v58
    %1566 = vmatprep.subr.mxu0 0.0
    %1567 = vmatpush1.msra.mxu0 0.0
    %1568 = vmatprep.subr.mxu0 0.0
    %1569 = vmatpush1.msra.mxu0 0.0
    %1570 = vmatprep.subr.mxu0 0.0
    %1571 = vmatpush1.msra.mxu0 0.0
    %1572 = vmatprep.subr.mxu0 0.0
    %1573 = vmatpush1.msra.mxu0 0.0
    %1574 = vmatprep.subr.mxu0 0.0
    %1575 = vmatpush1.msra.mxu0 0.0
    %1576 = vmatprep.subr.mxu0 0.0
    %1577 = vmatpush1.msra.mxu0 0.0
    %1578 = vmatprep.subr.mxu0 0.0
    %1579 = vmatpush1.msra.mxu0 0.0
    %1580 = vmatprep.subr.mxu0 0.0
    %1581 = vmatpush1.msra.mxu0 0.0
    %1582 = vmatprep.subr.mxu0 0.0
    %1583 = vmatpush1.msra.mxu0 0.0
    %1584 = vmatprep.subr.mxu0 0.0
    %1585 = vmatpush1.msra.mxu0 0.0
    %1586 = vmatprep.subr.mxu0 0.0
    %1587 = vmatpush1.msra.mxu0 0.0
    %1588 = vmatprep.subr.mxu0 0.0
    %1589 = vmatpush1.msra.mxu0 0.0
    %1590 = vmatprep.subr.mxu0 0.0
    %1591 = vmatpush1.msra.mxu0 0.0
    %1592 = vmatprep.subr.mxu0 0.0
    %1593 = vmatpush1.msra.mxu0 0.0
    %1594 = vmatprep.subr.mxu0 0.0
    %1595 = vmatpush1.msra.mxu0 0.0
    %1596 = vmatprep.subr.mxu0 0.0
    %1597 = vmatpush1.msra.mxu0 0.0
    %1598 = vmatprep.subr.mxu0 0.0
    %1599 = vmatpush1.msra.mxu0 0.0
    %1600 = vmatprep.subr.mxu0 0.0
    %1601 = vmatpush1.msra.mxu0 0.0
    %1602 = vmatprep.subr.mxu0 0.0
    %1603 = vmatpush1.msra.mxu0 0.0
    %1604 = vmatprep.subr.mxu0 0.0
    %1605 = vmatpush1.msra.mxu0 0.0
    %1606 = vmatprep.subr.mxu0 0.0
    %1607 = vmatpush1.msra.mxu0 0.0
    %1608 = vmatprep.subr.mxu0 0.0
    %1609 = vmatpush1.msra.mxu0 0.0
    %1610 = vmatprep.subr.mxu0 0.0
    %1611 = vmatpush1.msra.mxu0 0.0
    %1612 = vmatprep.subr.mxu0 0.0
    %1613 = vmatpush1.msra.mxu0 0.0
    %1614 = vmatprep.subr.mxu0 0.0
    %1615 = vmatpush1.msra.mxu0 0.0
    %1616 = vmatprep.subr.mxu0 0.0
    %1617 = vmatpush1.msra.mxu0 0.0
    %1618 = vmatprep.subr.mxu0 0.0
    %1619 = vmatpush1.msra.mxu0 0.0
    %1620 = vmatprep.subr.mxu0 0.0
    %1621 = vmatpush1.msra.mxu0 0.0
    %1622 = vmatprep.mubr.f32.mxu0 0.0
    %1623 = vmatmul.mubr.f32.gmra.mrb[0].mxu0 %v1556
    %v1624 = vpop.f32.mrb[0].mxu0
    %v1625 = vadd.f32 0.0, %v1624
    %v1626 = vpop.f32.mrb[0].mxu0
    %1627 = vdwg.mxu0
    %s1628 = scalar_lea.vmem %s0, 56
    %v1629 = vld [vmem:[%s1628] sm:$0xff]
    %1631 = vset.pattern.permute.xlu0 0
    %1632 = vperm.xlu0 %1631, %v1629
    %v1633 = vpop.permute.xlu0 %1632
    %v1635 = vmul.f32 %v1633, %v144
    %v1636 = vadd.f32 %v1635, %v151
    %v1637 = vadd.f32 %v1636, %v1523
    %v1638 = vxor.u32 %v1637, 2147483648
    %v1639 = vmul.f32 %v1638, 1.442695
    %v1640 = vpow.pop %v1639
    %v1641 = vadd.f32 %v1640, 1.0
    %v1642 = vrcp.pop %v1641
    %v1643 = vmul.f32 1.0, %v1642
    %v1644 = vtanh.pop %v1637
    %v1645 = vmul.f32 %v1643, %v1444
    %1647 = vrot.lane.b32.xlu0 %v1644, 32
    %v1648 = vpop.permute.xlu0 %1647
    %v1650 = vmul.f32 %v1643, %v1648
    %1652 = vrot.lane.b32.xlu0 %v1650, 32
    %v1653 = vpop.permute.xlu0 %1652
    %v1655 = vadd.f32 %v1645, %v1653
    %v1656 = vtanh.pop %v1655
    %1658 = vrot.lane.b32.xlu0 %v1656, 32
    %v1659 = vpop.permute.xlu0 %1658
    %v1661 = vmul.f32 %v1643, %v1659
    %1663 = vrot.lane.b32.xlu0 %v1661, 64
    %v1664 = vpop.permute.xlu0 %1663
    %v1665 = vsel %vm60, %v1664, 0
    %1667 = vmatprep.subr.mxu0 %v48
    %1668 = vmatpush1.msra.mxu0 %v47
    %1669 = vmatprep.subr.mxu0 %v50
    %1670 = vmatpush1.msra.mxu0 %v49
    %1671 = vmatprep.subr.mxu0 %v52
    %1672 = vmatpush1.msra.mxu0 %v51
    %1673 = vmatprep.subr.mxu0 %v54
    %1674 = vmatpush1.msra.mxu0 %v53
    %1675 = vmatprep.subr.mxu0 0.0
    %1676 = vmatpush1.msra.mxu0 0.0
    %1677 = vmatprep.subr.mxu0 0.0
    %1678 = vmatpush1.msra.mxu0 0.0
    %1679 = vmatprep.subr.mxu0 0.0
    %1680 = vmatpush1.msra.mxu0 0.0
    %1681 = vmatprep.subr.mxu0 0.0
    %1682 = vmatpush1.msra.mxu0 0.0
    %1683 = vmatprep.subr.mxu0 0.0
    %1684 = vmatpush1.msra.mxu0 0.0
    %1685 = vmatprep.subr.mxu0 0.0
    %1686 = vmatpush1.msra.mxu0 0.0
    %1687 = vmatprep.subr.mxu0 0.0
    %1688 = vmatpush1.msra.mxu0 0.0
    %1689 = vmatprep.subr.mxu0 0.0
    %1690 = vmatpush1.msra.mxu0 0.0
    %1691 = vmatprep.subr.mxu0 0.0
    %1692 = vmatpush1.msra.mxu0 0.0
    %1693 = vmatprep.subr.mxu0 0.0
    %1694 = vmatpush1.msra.mxu0 0.0
    %1695 = vmatprep.subr.mxu0 0.0
    %1696 = vmatpush1.msra.mxu0 0.0
    %1697 = vmatprep.subr.mxu0 0.0
    %1698 = vmatpush1.msra.mxu0 0.0
    %1699 = vmatprep.subr.mxu0 0.0
    %1700 = vmatpush1.msra.mxu0 0.0
    %1701 = vmatprep.subr.mxu0 0.0
    %1702 = vmatpush1.msra.mxu0 0.0
    %1703 = vmatprep.subr.mxu0 0.0
    %1704 = vmatpush1.msra.mxu0 0.0
    %1705 = vmatprep.subr.mxu0 0.0
    %1706 = vmatpush1.msra.mxu0 0.0
    %1707 = vmatprep.subr.mxu0 0.0
    %1708 = vmatpush1.msra.mxu0 0.0
    %1709 = vmatprep.subr.mxu0 0.0
    %1710 = vmatpush1.msra.mxu0 0.0
    %1711 = vmatprep.subr.mxu0 0.0
    %1712 = vmatpush1.msra.mxu0 0.0
    %1713 = vmatprep.subr.mxu0 0.0
    %1714 = vmatpush1.msra.mxu0 0.0
    %1715 = vmatprep.subr.mxu0 0.0
    %1716 = vmatpush1.msra.mxu0 0.0
    %1717 = vmatprep.subr.mxu0 0.0
    %1718 = vmatpush1.msra.mxu0 0.0
    %1719 = vmatprep.subr.mxu0 0.0
    %1720 = vmatpush1.msra.mxu0 0.0
    %1721 = vmatprep.subr.mxu0 0.0
    %1722 = vmatpush1.msra.mxu0 0.0
    %1723 = vmatprep.subr.mxu0 0.0
    %1724 = vmatpush1.msra.mxu0 0.0
    %1725 = vmatprep.subr.mxu0 0.0
    %1726 = vmatpush1.msra.mxu0 0.0
    %1727 = vmatprep.subr.mxu0 0.0
    %1728 = vmatpush1.msra.mxu0 0.0
    %1729 = vmatprep.subr.mxu0 0.0
    %1730 = vmatpush1.msra.mxu0 0.0
    %1731 = vmatprep.mubr.f32.mxu0 0.0
    %1732 = vmatmul.mubr.f32.gmra.mrb[0].mxu0 %v1665
    %v1733 = vpop.f32.mrb[0].mxu0
    %v1734 = vpop.f32.mrb[0].mxu0
    %v1735 = vadd.f32 0.0, %v1734
    %1736 = vdwg.mxu0
    %v1737 = vadd.f32 %v1735, %v1625
    %v1738 = vadd.f32 %v1737, %v260
    %v1739 = vxor.u32 %v1738, 2147483648
    %v1740 = vmul.f32 %v1739, 1.442695
    %v1741 = vpow.pop %v1740
    %v1742 = vadd.f32 %v1741, 1.0
    %v1743 = vrcp.pop %v1742
    %v1744 = vmul.f32 1.0, %v1743
    %v1745 = vtanh.pop %v1738
    %v1746 = vmul.f32 %v1744, %v1546
    %1748 = vrot.lane.b32.xlu0 %v1745, 32
    %v1749 = vpop.permute.xlu0 %1748
    %v1751 = vmul.f32 %v1744, %v1749
    %1753 = vrot.lane.b32.xlu0 %v1751, 32
    %v1754 = vpop.permute.xlu0 %1753
    %v1756 = vadd.f32 %v1746, %v1754
    %v1757 = vtanh.pop %v1756
    %1759 = vrot.lane.b32.xlu0 %v1757, 32
    %v1760 = vpop.permute.xlu0 %1759
    %v1762 = vmul.f32 %v1744, %v1760
    %v1763 = vld [vmem:[%s6] sm:$0x1]
    %v1765 = vlaneseq
    %v1766 = vshrl.u32 %v1765, 7
    %v1767 = vsub.s32 0, %v1766
    %v1768 = vrot.slane %v1763, %v1767
    %1769 = vrot.lane.b32.xlu0 %v1768, 64
    %v1770 = vpop.permute.xlu0 %1769
    %v1772 = vmul.f32 %v1762, %v1770
    %1774 = vrot.lane.b32.xlu0 %v1772, 64
    %v1775 = vpop.permute.xlu0 %1774
    %v1777 = vsel %vm60, %v1775, 0.0
    %1778 = vadd.xlane.f32.xlu0 %v1777
    %v1779 = vpop.xlane.xlu0 %1778
    %v1780 = vld [vmem:[#allocation2] sm:$0x1]
    %v1782 = vlaneseq
    %v1783 = vshrl.u32 %v1782, 7
    %v1784 = vsub.s32 0, %v1783
    %v1785 = vrot.slane %v1780, %v1784
    %v1787 = vadd.f32 %v1779, %v1785
    %vm1788 = vcmask 7168
    %1789 = vst.msk [vmem:[%s8] sm:$0xff] %vm1788, %v1787
    // Predicated region
    $region38: #{tpu_custom_call.1} parent=1 // pred_check
      _
    $region39: #{tpu_custom_call.1} parent=1 // pred_check_branch
      %1791 = sbr.rel (0) target = $region41
    $region40: #{tpu_custom_call.1} parent=1 // pred_region
      _
    $region41: #{tpu_custom_call.1} parent=1 // pred_fallthru
      _
    // Predicated region
    $region42: #{tpu_custom_call.1} parent=1 // pred_check
      _
    $region43: #{tpu_custom_call.1} parent=1 // pred_check_branch
      %1793 = sbr.rel (0) target = $region45
    $region44: #{tpu_custom_call.1} parent=1 // pred_region
      _
    $region45: #{tpu_custom_call.1} parent=1 // pred_fallthru
      _
    %1794 = vsyncpa [#allocation4], 1

</llo_original>
